<compile_context>
chip_gen: v6e
topology: v6e:2x2x1
jax: 0.10.0
libtpu: 0.0.40
codegen_flags: <defaults>
</compile_context>

<pallas_src>
import jax
import jax.numpy as jnp
from jax import lax
from jax.experimental import pallas as pl
from jax.experimental.pallas import tpu as pltpu


# ------------------------------------------------------------------ fused forward wrapper
def graph_attention_pool(a_tiles, x_flat, seg_big, w1p, b1, w2p, b2g, *,
                         num_graphs, graphs_per_tile, out_feats):
    """Batched fused forward pass. Returns pooled features of shape (num_graphs, out_feats)."""
    num_tiles, gn, _ = a_tiles.shape
    in_feats = x_flat.shape[1]
    OUT = out_feats
    GT = graphs_per_tile
    flat_out = GT * OUT                         # 128 lanes per output row

    def kernel(a_ref, x_ref, seg_ref, w1_ref, b1_ref, w2_ref, b2_ref, out_ref):
        A = a_ref[0]                            # (gn, gn) block-diag, row-normalized adjacency
        X = x_ref[...]                          # (gn, in_feats)

        # ---- SAGEConv layer 1 (mean) + ReLU: one fused [self | neighbor] MXU matmul --------
        ax = jnp.dot(A, X, preferred_element_type=jnp.float32)                   # (gn, in)
        h1 = jnp.dot(jnp.concatenate([X, ax], axis=-1), w1_ref[...],
                     preferred_element_type=jnp.float32) + b1_ref[...]           # (gn, hid)
        h1 = jnp.maximum(h1, 0.0)

        # ---- SAGEConv layer 2 + folded gate column: one fused matmul -> [h2 | gate] --------
        ah1 = jnp.dot(A, h1, preferred_element_type=jnp.float32)                 # (gn, hid)
        h2g = jnp.dot(jnp.concatenate([h1, ah1], axis=-1), w2_ref[...],
                      preferred_element_type=jnp.float32) + b2_ref[...]          # (gn, out+1)

        h2 = h2g[:, :OUT]                                                        # (gn, out)
        col = lax.broadcasted_iota(jnp.int32, h2g.shape, 1)
        gate = jnp.sum(jnp.where(col == OUT, h2g, 0.0), axis=1, keepdims=True)   # (gn, 1)

        # ---- GlobalAttentionPooling: per-graph softmax over gate, weighted sum -------------
        seg = seg_ref[...]                       # (gn, GT*out): 1 iff node belongs to lane's graph
        on = seg > 0.0
        neg = jnp.float32(-1e30)
        # per-graph max, broadcast back to nodes, via two masked reduces (no transpose/reshape)
        gmax = jnp.max(jnp.where(on, gate, neg), axis=0, keepdims=True)          # (1, GT*out)
        node_max = jnp.max(jnp.where(on, gmax, neg), axis=1, keepdims=True)      # (gn, 1)
        e = jnp.exp(gate - node_max)                                             # (gn, 1)

        # Flattened lane-dense pooled result: lane g*out+f = sum_{n in g} e_n h2[n,f] / sum e_n.
        eseg = seg * e                                                           # (gn, GT*out)
        h2t = jnp.concatenate([h2] * GT, axis=-1)                                # (gn, GT*out)
        num = jnp.sum(eseg * h2t, axis=0, keepdims=True)                         # (1, GT*out)
        den = jnp.sum(eseg, axis=0, keepdims=True)                               # (1, GT*out)
        out_ref[...] = (num * pl.reciprocal(den, approx=True))[None]             # (1, 1, 128)

    def _const(arr):  # tile-invariant 2-D operand: stays resident in VMEM across grid steps
        return pl.BlockSpec(arr.shape, lambda t: (0, 0))

    out = pl.pallas_call(
        kernel,
        out_shape=jax.ShapeDtypeStruct((num_tiles, 1, flat_out), jnp.float32),
        grid=(num_tiles,),
        in_specs=[
            pl.BlockSpec((1, gn, gn), lambda t: (t, 0, 0)),       # block-diag adjacency tile
            pl.BlockSpec((gn, in_feats), lambda t: (t, 0)),       # node-feature tile
            _const(seg_big),
            _const(w1p), _const(b1),
            _const(w2p), _const(b2g),
        ],
        out_specs=pl.BlockSpec((1, 1, flat_out), lambda t: (t, 0, 0)),  # one 128-lane row / step
        compiler_params=pltpu.CompilerParams(
            dimension_semantics=("parallel",),      # batch tiles split across TCs on v7x
            vmem_limit_bytes=32 << 20),
    )(a_tiles, x_flat, seg_big, w1p, b1, w2p, b2g)

    return out.reshape(num_graphs, out_feats)


# ----------------------------------------------------------------------------- setup -----
def init_params(key, in_feats, hidden_feats, out_feats):
    ks = jax.random.split(key, 8)
    scale = 0.2
    ws1 = scale * jax.random.normal(ks[0], (in_feats, hidden_feats), jnp.float32)
    wn1 = scale * jax.random.normal(ks[1], (in_feats, hidden_feats), jnp.float32)
    b1 = 0.05 * jax.random.normal(ks[2], (1, hidden_feats), jnp.float32)
    ws2 = scale * jax.random.normal(ks[3], (hidden_feats, out_feats), jnp.float32)
    wn2 = scale * jax.random.normal(ks[4], (hidden_feats, out_feats), jnp.float32)
    b2 = 0.05 * jax.random.normal(ks[5], (1, out_feats), jnp.float32)
    wg = scale * jax.random.normal(ks[6], (1, out_feats), jnp.float32)   # gate weight (row)
    bg = 0.05 * jax.random.normal(ks[7], (1, 1), jnp.float32)
    return (ws1, wn1, b1, ws2, wn2, b2, wg, bg)


def pack_params(params):
    """Host-side weight packing for the fused kernel (self|neighbor stack + gate column fold)."""
    ws1, wn1, b1, ws2, wn2, b2, wg, bg = params
    w1p = jnp.concatenate([ws1, wn1], axis=0)                    # (2*in, hid)
    ws2g = jnp.concatenate([ws2, ws2 @ wg.T], axis=1)            # (hid, out+1)
    wn2g = jnp.concatenate([wn2, wn2 @ wg.T], axis=1)            # (hid, out+1)
    w2p = jnp.concatenate([ws2g, wn2g], axis=0)                  # (2*hid, out+1)
    b2g = jnp.concatenate([b2, b2 @ wg.T + bg], axis=1)          # (1, out+1)
    return w1p, b1, w2p, b2g


def build_graph(n, chord):
    """Deterministic small graph: ring + chord edges. Returns row-normalized (mean) adjacency."""
    src, dst = [], []
    for i in range(n):
        src += [i, i]
        dst += [(i + 1) % n, (i + chord) % n]
    A = jnp.zeros((n, n), jnp.float32)
    A = A.at[jnp.array(dst), jnp.array(src)].set(1.0)   # row i collects in-neighbors of i
    deg = jnp.sum(A, axis=1, keepdims=True)
    return jnp.where(deg > 0, A / jnp.maximum(deg, 1.0), 0.0)


# TODO(synk): true sparse/edge-list SAGEConv gather-scatter has no clean dense-Pallas equivalent;
# small graphs are batched into dense block-diagonal adjacency tiles instead (DGL-style batching).
def assemble_block_diag_tiles(a_all, graphs_per_tile):
    """Stack per-graph adjacencies into per-tile block-diagonal matrices."""
    num_graphs, n, _ = a_all.shape
    num_tiles = num_graphs // graphs_per_tile
    gn = graphs_per_tile * n
    tiles = jnp.zeros((num_tiles, gn, gn), jnp.float32)
    for t in range(num_tiles):
        for k in range(graphs_per_tile):
            g = t * graphs_per_tile + k
            tiles = tiles.at[t, k * n:(k + 1) * n, k * n:(k + 1) * n].set(a_all[g])
    return tiles


def reference_forward_single(a_norm, x, params):
    """Pure-JAX reference for ONE graph (same semantics as the PyTorch module)."""
    ws1, wn1, b1, ws2, wn2, b2, wg, bg = params
    h1 = jnp.maximum(x @ ws1 + (a_norm @ x) @ wn1 + b1, 0.0)
    h2 = h1 @ ws2 + (a_norm @ h1) @ wn2 + b2
    gate = h2 @ wg.T + bg                      # (N, 1)
    alpha = jax.nn.softmax(gate, axis=0)
    return jnp.sum(alpha * h2, axis=0)         # (out_feats,)


# ----------------------------------------------------------------------------- main ------
if __name__ == "__main__":
    N = 16                 # nodes per graph
    IN_FEATS = 16
    HIDDEN_FEATS = 32
    OUT_FEATS = 16
    NUM_GRAPHS = 16        # graphs in the batch
    GRAPHS_PER_TILE = 8    # gn=128: matches v5e's 128-wide MXU; keeps 2 parallel tiles for v7x.
                           # (v6e-only: GRAPHS_PER_TILE=16 -> gn=256 fills its 256-wide MXU.)

    key = jax.random.PRNGKey(0)
    k_feat, k_param = jax.random.split(key)

    x_all = jax.random.normal(k_feat, (NUM_GRAPHS, N, IN_FEATS), jnp.float32)   # (G, N, F)
    a_all = jnp.stack([build_graph(N, 2 + (g % (N - 3))) for g in range(NUM_GRAPHS)])
    params = init_params(k_param, IN_FEATS, HIDDEN_FEATS, OUT_FEATS)
    w1p, b1, w2p, b2g = pack_params(params)

    # Host-side batching: block-diagonal adjacency tiles, flattened node features, and the
    # tile-invariant segment mask (node n "on" for the 16 lanes of its own graph).
    a_tiles = assemble_block_diag_tiles(a_all, GRAPHS_PER_TILE)                  # (T, GT*N, GT*N)
    x_flat = x_all.reshape(NUM_GRAPHS * N, IN_FEATS)                             # (G*N, F)
    seg_big = jnp.kron(jnp.eye(GRAPHS_PER_TILE, dtype=jnp.float32),
                       jnp.ones((N, OUT_FEATS), jnp.float32))                    # (GT*N, GT*out)

    pooled = graph_attention_pool(a_tiles, x_flat, seg_big, w1p, b1, w2p, b2g,
                                  num_graphs=NUM_GRAPHS,
                                  graphs_per_tile=GRAPHS_PER_TILE,
                                  out_feats=OUT_FEATS)
    pooled = jax.block_until_ready(pooled)

    ref = jax.vmap(reference_forward_single, in_axes=(0, 0, None))(a_all, x_all, params)
    assert pooled.shape == (NUM_GRAPHS, OUT_FEATS)
    # slightly relaxed tolerance because of pl.reciprocal(approx=True) in the softmax denominator
    assert jnp.allclose(pooled, ref, atol=2e-3, rtol=2e-3), "mismatch vs reference"

    print("KERNEL_OK")
</pallas_src>

<mosaic_0001>
module attributes {stable_mosaic.version = 11 : i64} {
  func.func @kernel(%arg0: i32, %arg1: memref<1x128x128xf32, #tpu.memory_space<vmem>>, %arg2: memref<128x16xf32, #tpu.memory_space<vmem>>, %arg3: memref<128x128xf32, #tpu.memory_space<vmem>>, %arg4: memref<32x32xf32, #tpu.memory_space<vmem>>, %arg5: memref<1x32xf32, #tpu.memory_space<vmem>>, %arg6: memref<64x17xf32, #tpu.memory_space<vmem>>, %arg7: memref<1x17xf32, #tpu.memory_space<vmem>>, %arg8: memref<1x1x128xf32, #tpu.memory_space<vmem>>) attributes {dimension_semantics = [#tpu.dimension_semantics<parallel>], iteration_bounds = array<i64: 2>, scalar_prefetch = 0 : i64, scratch_operands = 0 : i64, tpu.core_type = #tpu.core_type<tc>, window_params = [{transform_indices = @transform_0, window_bounds = array<i64: 1, 128, 128>}, {transform_indices = @transform_1, window_bounds = array<i64: 128, 16>}, {pipeline_mode = #tpu.pipeline_mode<synchronous>, transform_indices = @transform_2, window_bounds = array<i64: 128, 128>}, {pipeline_mode = #tpu.pipeline_mode<synchronous>, transform_indices = @transform_3, window_bounds = array<i64: 32, 32>}, {pipeline_mode = #tpu.pipeline_mode<synchronous>, transform_indices = @transform_4, window_bounds = array<i64: 1, 32>}, {pipeline_mode = #tpu.pipeline_mode<synchronous>, transform_indices = @transform_5, window_bounds = array<i64: 64, 17>}, {pipeline_mode = #tpu.pipeline_mode<synchronous>, transform_indices = @transform_6, window_bounds = array<i64: 1, 17>}, {transform_indices = @transform_7, window_bounds = array<i64: 1, 1, 128>}]} {
    %c0 = arith.constant 0 : index
    %c0_0 = arith.constant 0 : index
    %c0_1 = arith.constant 0 : index
    %0 = vector.load %arg1[%c0, %c0_0, %c0_1] : memref<1x128x128xf32, #tpu.memory_space<vmem>>, vector<1x128x128xf32>
    %1 = vector.shape_cast %0 : vector<1x128x128xf32> to vector<128x128xf32>
    %c0_2 = arith.constant 0 : index
    %c0_3 = arith.constant 0 : index
    %2 = vector.load %arg2[%c0_2, %c0_3] : memref<128x16xf32, #tpu.memory_space<vmem>>, vector<128x16xf32>
    %cst = arith.constant dense<0.000000e+00> : vector<128x16xf32>
    %3 = tpu.matmul %1, %2, %cst {dimension_numbers = #tpu.dot_dimension_numbers<[1], [0], [0], [1], [0, 0, 1, 1], [], []>} : vector<128x128xf32>, vector<128x16xf32>, vector<128x16xf32> -> vector<128x16xf32>
    %4 = tpu.concatenate %2, %3 in 1 : vector<128x16xf32>, vector<128x16xf32> -> vector<128x32xf32>
    %c0_4 = arith.constant 0 : index
    %c0_5 = arith.constant 0 : index
    %5 = vector.load %arg4[%c0_4, %c0_5] : memref<32x32xf32, #tpu.memory_space<vmem>>, vector<32x32xf32>
    %cst_6 = arith.constant dense<0.000000e+00> : vector<128x32xf32>
    %6 = tpu.matmul %4, %5, %cst_6 {dimension_numbers = #tpu.dot_dimension_numbers<[1], [0], [0], [1], [0, 0, 1, 1], [], []>} : vector<128x32xf32>, vector<32x32xf32>, vector<128x32xf32> -> vector<128x32xf32>
    %c0_7 = arith.constant 0 : index
    %c0_8 = arith.constant 0 : index
    %7 = vector.load %arg5[%c0_7, %c0_8] : memref<1x32xf32, #tpu.memory_space<vmem>>, vector<1x32xf32>
    %8 = vector.broadcast %7 : vector<1x32xf32> to vector<128x32xf32>
    %9 = arith.addf %6, %8 : vector<128x32xf32>
    %cst_9 = arith.constant 0.000000e+00 : f32
    %10 = vector.broadcast %cst_9 : f32 to vector<128x32xf32>
    %11 = arith.maximumf %9, %10 : vector<128x32xf32>
    %cst_10 = arith.constant dense<0.000000e+00> : vector<128x32xf32>
    %12 = tpu.matmul %1, %11, %cst_10 {dimension_numbers = #tpu.dot_dimension_numbers<[1], [0], [0], [1], [0, 0, 1, 1], [], []>} : vector<128x128xf32>, vector<128x32xf32>, vector<128x32xf32> -> vector<128x32xf32>
    %13 = tpu.concatenate %11, %12 in 1 : vector<128x32xf32>, vector<128x32xf32> -> vector<128x64xf32>
    %c0_11 = arith.constant 0 : index
    %c0_12 = arith.constant 0 : index
    %14 = vector.load %arg6[%c0_11, %c0_12] : memref<64x17xf32, #tpu.memory_space<vmem>>, vector<64x17xf32>
    %cst_13 = arith.constant dense<0.000000e+00> : vector<128x17xf32>
    %15 = tpu.matmul %13, %14, %cst_13 {dimension_numbers = #tpu.dot_dimension_numbers<[1], [0], [0], [1], [0, 0, 1, 1], [], []>} : vector<128x64xf32>, vector<64x17xf32>, vector<128x17xf32> -> vector<128x17xf32>
    %c0_14 = arith.constant 0 : index
    %c0_15 = arith.constant 0 : index
    %16 = vector.load %arg7[%c0_14, %c0_15] : memref<1x17xf32, #tpu.memory_space<vmem>>, vector<1x17xf32>
    %17 = vector.broadcast %16 : vector<1x17xf32> to vector<128x17xf32>
    %18 = arith.addf %15, %17 : vector<128x17xf32>
    %19 = vector.extract_strided_slice %18 {offsets = [0, 0], sizes = [128, 16], strides = [1, 1]} : vector<128x17xf32> to vector<128x16xf32>
    %20 = tpu.iota {dimensions = array<i32: 1>} : vector<128x17xi32>
    %c16_i32 = arith.constant 16 : i32
    %21 = vector.broadcast %c16_i32 : i32 to vector<128x17xi32>
    %22 = arith.cmpi eq, %20, %21 : vector<128x17xi32>
    %cst_16 = arith.constant 0.000000e+00 : f32
    %23 = vector.broadcast %cst_16 : f32 to vector<128x17xf32>
    %24 = arith.select %22, %18, %23 : vector<128x17xi1>, vector<128x17xf32>
    %cst_17 = arith.constant dense<0.000000e+00> : vector<128xf32>
    %25 = vector.multi_reduction <add>, %24, %cst_17 [1] : vector<128x17xf32> to vector<128xf32>
    %26 = vector.shape_cast %25 : vector<128xf32> to vector<128x1xf32>
    %c0_18 = arith.constant 0 : index
    %c0_19 = arith.constant 0 : index
    %27 = vector.load %arg3[%c0_18, %c0_19] : memref<128x128xf32, #tpu.memory_space<vmem>>, vector<128x128xf32>
    %cst_20 = arith.constant 0.000000e+00 : f32
    %28 = vector.broadcast %cst_20 : f32 to vector<128x128xf32>
    %29 = arith.cmpf ogt, %27, %28 : vector<128x128xf32>
    %cst_21 = arith.constant -1.000000e+30 : f32
    %30 = vector.shape_cast %26 : vector<128x1xf32> to vector<128x1xf32>
    %31 = vector.broadcast %30 : vector<128x1xf32> to vector<128x128xf32>
    %32 = vector.broadcast %cst_21 : f32 to vector<128x128xf32>
    %33 = arith.select %29, %31, %32 : vector<128x128xi1>, vector<128x128xf32>
    %cst_22 = arith.constant dense<0xFF800000> : vector<128xf32>
    %34 = vector.multi_reduction <maximumf>, %33, %cst_22 [0] : vector<128x128xf32> to vector<128xf32>
    %35 = vector.shape_cast %34 : vector<128xf32> to vector<1x128xf32>
    %cst_23 = arith.constant -1.000000e+30 : f32
    %36 = vector.shape_cast %35 : vector<1x128xf32> to vector<1x128xf32>
    %37 = vector.broadcast %36 : vector<1x128xf32> to vector<128x128xf32>
    %38 = vector.broadcast %cst_23 : f32 to vector<128x128xf32>
    %39 = arith.select %29, %37, %38 : vector<128x128xi1>, vector<128x128xf32>
    %cst_24 = arith.constant dense<0xFF800000> : vector<128xf32>
    %40 = vector.multi_reduction <maximumf>, %39, %cst_24 [1] : vector<128x128xf32> to vector<128xf32>
    %41 = vector.shape_cast %40 : vector<128xf32> to vector<128x1xf32>
    %42 = arith.subf %26, %41 : vector<128x1xf32>
    %43 = math.exp %42 : vector<128x1xf32>
    %44 = vector.broadcast %43 : vector<128x1xf32> to vector<128x128xf32>
    %45 = arith.mulf %27, %44 : vector<128x128xf32>
    %46 = tpu.concatenate %19, %19, %19, %19, %19, %19, %19, %19 in 1 : vector<128x16xf32>, vector<128x16xf32>, vector<128x16xf32>, vector<128x16xf32>, vector<128x16xf32>, vector<128x16xf32>, vector<128x16xf32>, vector<128x16xf32> -> vector<128x128xf32>
    %47 = arith.mulf %45, %46 : vector<128x128xf32>
    %cst_25 = arith.constant dense<0.000000e+00> : vector<128xf32>
    %48 = vector.multi_reduction <add>, %47, %cst_25 [0] : vector<128x128xf32> to vector<128xf32>
    %49 = vector.shape_cast %48 : vector<128xf32> to vector<1x128xf32>
    %cst_26 = arith.constant dense<0.000000e+00> : vector<128xf32>
    %50 = vector.multi_reduction <add>, %45, %cst_26 [0] : vector<128x128xf32> to vector<128xf32>
    %51 = vector.shape_cast %50 : vector<128xf32> to vector<1x128xf32>
    %52 = tpu.reciprocal %51 {approx = true} : vector<1x128xf32> -> vector<1x128xf32>
    %53 = arith.mulf %49, %52 : vector<1x128xf32>
    %54 = vector.shape_cast %53 : vector<1x128xf32> to vector<1x1x128xf32>
    %c0_27 = arith.constant 0 : index
    %c0_28 = arith.constant 0 : index
    %c0_29 = arith.constant 0 : index
    %55 = vector.load %arg8[%c0_27, %c0_28, %c0_29] : memref<1x1x128xf32, #tpu.memory_space<vmem>>, vector<1x1x128xf32>
    tpu.vector_store %arg8[%c0_27, %c0_28, %c0_29], %54 {strides = array<i32>} : memref<1x1x128xf32, #tpu.memory_space<vmem>>, vector<1x1x128xf32>,
    return
  }
  func.func @transform_0(%arg0: i32) -> (i32, i32, i32) {
    %c0_i32 = arith.constant 0 : i32
    %c0_i32_0 = arith.constant 0 : i32
    %c0_i32_1 = arith.constant 0 : i32
    return %arg0, %c0_i32, %c0_i32_0 : i32, i32, i32
  }
  func.func @transform_1(%arg0: i32) -> (i32, i32) {
    %c0_i32 = arith.constant 0 : i32
    %c0_i32_0 = arith.constant 0 : i32
    return %arg0, %c0_i32 : i32, i32
  }
  func.func @transform_2(%arg0: i32) -> (i32, i32) {
    %c0_i32 = arith.constant 0 : i32
    %c0_i32_0 = arith.constant 0 : i32
    %c0_i32_1 = arith.constant 0 : i32
    return %c0_i32, %c0_i32_0 : i32, i32
  }
  func.func @transform_3(%arg0: i32) -> (i32, i32) {
    %c0_i32 = arith.constant 0 : i32
    %c0_i32_0 = arith.constant 0 : i32
    %c0_i32_1 = arith.constant 0 : i32
    return %c0_i32, %c0_i32_0 : i32, i32
  }
  func.func @transform_4(%arg0: i32) -> (i32, i32) {
    %c0_i32 = arith.constant 0 : i32
    %c0_i32_0 = arith.constant 0 : i32
    %c0_i32_1 = arith.constant 0 : i32
    return %c0_i32, %c0_i32_0 : i32, i32
  }
  func.func @transform_5(%arg0: i32) -> (i32, i32) {
    %c0_i32 = arith.constant 0 : i32
    %c0_i32_0 = arith.constant 0 : i32
    %c0_i32_1 = arith.constant 0 : i32
    return %c0_i32, %c0_i32_0 : i32, i32
  }
  func.func @transform_6(%arg0: i32) -> (i32, i32) {
    %c0_i32 = arith.constant 0 : i32
    %c0_i32_0 = arith.constant 0 : i32
    %c0_i32_1 = arith.constant 0 : i32
    return %c0_i32, %c0_i32_0 : i32, i32
  }
  func.func @transform_7(%arg0: i32) -> (i32, i32, i32) {
    %c0_i32 = arith.constant 0 : i32
    %c0_i32_0 = arith.constant 0 : i32
    %c0_i32_1 = arith.constant 0 : i32
    return %arg0, %c0_i32, %c0_i32_0 : i32, i32, i32
  }
}

</mosaic_0001>

<llo_original>
// kernel: tpu_custom_call.1
$region0: #{tpu_custom_call.1}
  #allocation0 [shape = 'u32[]', space=smem, size = 0x4, offset = 0x4, fixed_abs, tag = 'smem constant byte address 0x4 - core index']
  #allocation1 [shape = 'u32[144,128]{1,0:T(1,128)}', space=vmem, size = 0x12000, scoped, tag = 'internal scratch']
  %s0 = inlined_call_operand.vmem [shape: f32[2,128,128], index: 0, kind: input, shape index: {}]
  %s1 = inlined_call_operand.vmem [shape: f32[256,16], index: 1, kind: input, shape index: {}]
  %s2 = inlined_call_operand.hbm [shape: f32[128,128], index: 2, kind: input, shape index: {}]
  %s3 = inlined_call_operand.vmem [shape: f32[32,32], index: 3, kind: input, shape index: {}]
  %s4 = inlined_call_operand.vmem [shape: f32[1,32], index: 4, kind: input, shape index: {}]
  %s5 = inlined_call_operand.vmem [shape: f32[64,17], index: 5, kind: input, shape index: {}]
  %s6 = inlined_call_operand.vmem [shape: f32[1,17], index: 6, kind: input, shape index: {}]
  %s7 = inlined_call_operand.hbm [shape: f32[2,1,128], index: 7, kind: output, shape index: {}]
  %s8 = sld [smem:[#allocation0]]
  $region65: #{tpu_custom_call.1} parent=0
    _
  %s10 = ssub.s32 1, %s8
  %s11 = scalar_select 0, %s10, %s8
  $region1: #{tpu_custom_call.1} parent=0
    #allocation2 [shape = 'u8[65536]{0}', space=vmem, size = 0x10000, scoped, tag = 'input window, operand 2, single buffered']
    #allocation3 [shape = 's32[2]{0}', space=sflag, size = 0x8, scoped, tag = 'scoped memory for tpu_custom_call.1']
    #allocation4 [shape = 's32[2]{0}', space=sflag, size = 0x8, scoped, tag = 'scoped memory for tpu_custom_call.1']
    #allocation5 [shape = 'u8[1024]{0}', space=vmem, size = 0x400, scoped, tag = 'output window, operand 0']
    %12 = vsyncpa [#allocation3], 0
    %13 = vsyncpa [#allocation4], 0
    %s14 = scalar_lea.sflag [#allocation4], 1
    %15 = vsyncpa %s14, 0
    loop: start=0, step=1, limit=4
    $region2: #{tpu_custom_call.1} parent=1 // loop_pre_header
      _
    $region3: #{tpu_custom_call.1} parent=1 // loop_header
      %s17 = sphi 0, %s21
      %p18 = scmp.ge.s32.totalorder %s17, 4
      %s27 = sphi 0, %s29
      %s30 = sphi 0, %s27
      %s31 = sphi 0, %s30
      %s47 = sphi 0, %s31
      %s53 = sphi 0, %s55
      %s56 = sphi 0, %s53
      %s57 = sphi 0, %s56
      %s73 = sphi 0, %s57
      %s77 = sphi 0, %s77
      %s79 = sphi 0, %s77
      %s80 = sphi 0, %s79
      %s94 = sphi 0, %s80
      %s98 = sphi 0, %s98
      %s100 = sphi 0, %s98
      %s101 = sphi 0, %s100
      %s115 = sphi 0, %s101
      %s119 = sphi 0, %s119
      %s121 = sphi 0, %s119
      %s122 = sphi 0, %s121
      %s136 = sphi 0, %s122
      %s140 = sphi 0, %s140
      %s142 = sphi 0, %s140
      %s143 = sphi 0, %s142
      %s157 = sphi 0, %s143
      %s161 = sphi 0, %s161
      %s163 = sphi 0, %s161
      %s164 = sphi 0, %s163
      %s178 = sphi 0, %s164
      %s184 = sphi 0, %s186
      %s187 = sphi 0, %s184
      %s188 = sphi 0, %s187
      %s204 = sphi 0, %s188
    $region4: #{tpu_custom_call.1} parent=1 // loop_header_branch
      %20 = sbr.rel (%p18) target = $region8
    $region5: #{tpu_custom_call.1} parent=1 // loop_body
      %s22 = ssub.s32 %s17, 1
      %s23 = ssub.s32 %s17, 2
      %s24 = sadd.s32 %s17, 1
      %s25 = ssub.s32 %s17, %s24
      %p26 = scmp.eq.s32.totalorder %s25, 0
      %s28 = sadd.s32 %s27, 1
      %s29 = scalar_select %p26, %s27, %s28
      %p32 = pneg %p26
      %p33 = scmp.eq.s32.totalorder %s17, 1
      %p34 = por %p32, %p33
      %p35 = scmp.ne.s32.totalorder %s27, %s30
      %p36 = scmp.eq.s32.totalorder %s17, 0
      %p37 = por %p35, %p36
      %p38 = scmp.ne.s32.totalorder %s27, %s30
      %p39 = scmp.eq.s32.totalorder %s22, 1
      %p40 = por %p38, %p39
      %p41 = scmp.ne.s32.totalorder %s30, %s31
      %p42 = scmp.eq.s32.totalorder %s22, 0
      %p43 = por %p41, %p42
      %p44 = scmp.ne.s32.totalorder %s30, %s31
      %p45 = scmp.eq.s32.totalorder %s23, 1
      %p46 = por %p44, %p45
      %p48 = scmp.ne.s32.totalorder %s31, %s47
      %p49 = scmp.eq.s32.totalorder %s23, 0
      %p50 = por %p48, %p49
      %s51 = ssub.s32 %s17, %s24
      %p52 = scmp.eq.s32.totalorder %s51, 0
      %s54 = sadd.s32 %s53, 1
      %s55 = scalar_select %p52, %s53, %s54
      %p58 = pneg %p52
      %p59 = scmp.eq.s32.totalorder %s17, 1
      %p60 = por %p58, %p59
      %p61 = scmp.ne.s32.totalorder %s53, %s56
      %p62 = scmp.eq.s32.totalorder %s17, 0
      %p63 = por %p61, %p62
      %p64 = scmp.ne.s32.totalorder %s53, %s56
      %p65 = scmp.eq.s32.totalorder %s22, 1
      %p66 = por %p64, %p65
      %p67 = scmp.ne.s32.totalorder %s56, %s57
      %p68 = scmp.eq.s32.totalorder %s22, 0
      %p69 = por %p67, %p68
      %p70 = scmp.ne.s32.totalorder %s56, %s57
      %p71 = scmp.eq.s32.totalorder %s23, 1
      %p72 = por %p70, %p71
      %p74 = scmp.ne.s32.totalorder %s57, %s73
      %p75 = scmp.eq.s32.totalorder %s23, 0
      %p76 = por %p74, %p75
      %s78 = sadd.s32 %s77, 1
      %p81 = scmp.eq.s32.totalorder %s17, 1
      %p82 = scmp.ne.s32.totalorder %s77, %s79
      %p83 = scmp.eq.s32.totalorder %s17, 0
      %p84 = por %p82, %p83
      %p85 = scmp.ne.s32.totalorder %s77, %s79
      %p86 = scmp.eq.s32.totalorder %s22, 1
      %p87 = por %p85, %p86
      %p88 = scmp.ne.s32.totalorder %s79, %s80
      %p89 = scmp.eq.s32.totalorder %s22, 0
      %p90 = por %p88, %p89
      %p91 = scmp.ne.s32.totalorder %s79, %s80
      %p92 = scmp.eq.s32.totalorder %s23, 1
      %p93 = por %p91, %p92
      %p95 = scmp.ne.s32.totalorder %s80, %s94
      %p96 = scmp.eq.s32.totalorder %s23, 0
      %p97 = por %p95, %p96
      %s99 = sadd.s32 %s98, 1
      %p102 = scmp.eq.s32.totalorder %s17, 1
      %p103 = scmp.ne.s32.totalorder %s98, %s100
      %p104 = scmp.eq.s32.totalorder %s17, 0
      %p105 = por %p103, %p104
      %p106 = scmp.ne.s32.totalorder %s98, %s100
      %p107 = scmp.eq.s32.totalorder %s22, 1
      %p108 = por %p106, %p107
      %p109 = scmp.ne.s32.totalorder %s100, %s101
      %p110 = scmp.eq.s32.totalorder %s22, 0
      %p111 = por %p109, %p110
      %p112 = scmp.ne.s32.totalorder %s100, %s101
      %p113 = scmp.eq.s32.totalorder %s23, 1
      %p114 = por %p112, %p113
      %p116 = scmp.ne.s32.totalorder %s101, %s115
      %p117 = scmp.eq.s32.totalorder %s23, 0
      %p118 = por %p116, %p117
      %s120 = sadd.s32 %s119, 1
      %p123 = scmp.eq.s32.totalorder %s17, 1
      %p124 = scmp.ne.s32.totalorder %s119, %s121
      %p125 = scmp.eq.s32.totalorder %s17, 0
      %p126 = por %p124, %p125
      %p127 = scmp.ne.s32.totalorder %s119, %s121
      %p128 = scmp.eq.s32.totalorder %s22, 1
      %p129 = por %p127, %p128
      %p130 = scmp.ne.s32.totalorder %s121, %s122
      %p131 = scmp.eq.s32.totalorder %s22, 0
      %p132 = por %p130, %p131
      %p133 = scmp.ne.s32.totalorder %s121, %s122
      %p134 = scmp.eq.s32.totalorder %s23, 1
      %p135 = por %p133, %p134
      %p137 = scmp.ne.s32.totalorder %s122, %s136
      %p138 = scmp.eq.s32.totalorder %s23, 0
      %p139 = por %p137, %p138
      %s141 = sadd.s32 %s140, 1
      %p144 = scmp.eq.s32.totalorder %s17, 1
      %p145 = scmp.ne.s32.totalorder %s140, %s142
      %p146 = scmp.eq.s32.totalorder %s17, 0
      %p147 = por %p145, %p146
      %p148 = scmp.ne.s32.totalorder %s140, %s142
      %p149 = scmp.eq.s32.totalorder %s22, 1
      %p150 = por %p148, %p149
      %p151 = scmp.ne.s32.totalorder %s142, %s143
      %p152 = scmp.eq.s32.totalorder %s22, 0
      %p153 = por %p151, %p152
      %p154 = scmp.ne.s32.totalorder %s142, %s143
      %p155 = scmp.eq.s32.totalorder %s23, 1
      %p156 = por %p154, %p155
      %p158 = scmp.ne.s32.totalorder %s143, %s157
      %p159 = scmp.eq.s32.totalorder %s23, 0
      %p160 = por %p158, %p159
      %s162 = sadd.s32 %s161, 1
      %p165 = scmp.eq.s32.totalorder %s17, 1
      %p166 = scmp.ne.s32.totalorder %s161, %s163
      %p167 = scmp.eq.s32.totalorder %s17, 0
      %p168 = por %p166, %p167
      %p169 = scmp.ne.s32.totalorder %s161, %s163
      %p170 = scmp.eq.s32.totalorder %s22, 1
      %p171 = por %p169, %p170
      %p172 = scmp.ne.s32.totalorder %s163, %s164
      %p173 = scmp.eq.s32.totalorder %s22, 0
      %p174 = por %p172, %p173
      %p175 = scmp.ne.s32.totalorder %s163, %s164
      %p176 = scmp.eq.s32.totalorder %s23, 1
      %p177 = por %p175, %p176
      %p179 = scmp.ne.s32.totalorder %s164, %s178
      %p180 = scmp.eq.s32.totalorder %s23, 0
      %p181 = por %p179, %p180
      %s182 = ssub.s32 %s17, %s24
      %p183 = scmp.eq.s32.totalorder %s182, 0
      %s185 = sadd.s32 %s184, 1
      %s186 = scalar_select %p183, %s184, %s185
      %p189 = pneg %p183
      %p190 = scmp.eq.s32.totalorder %s17, 1
      %p191 = por %p189, %p190
      %p192 = scmp.ne.s32.totalorder %s184, %s187
      %p193 = scmp.eq.s32.totalorder %s17, 0
      %p194 = por %p192, %p193
      %p195 = scmp.ne.s32.totalorder %s184, %s187
      %p196 = scmp.eq.s32.totalorder %s22, 1
      %p197 = por %p195, %p196
      %p198 = scmp.ne.s32.totalorder %s187, %s188
      %p199 = scmp.eq.s32.totalorder %s22, 0
      %p200 = por %p198, %p199
      %p201 = scmp.ne.s32.totalorder %s187, %s188
      %p202 = scmp.eq.s32.totalorder %s23, 1
      %p203 = por %p201, %p202
      %p205 = scmp.ne.s32.totalorder %s188, %s204
      %p206 = scmp.eq.s32.totalorder %s23, 0
      %p207 = por %p205, %p206
      %p208 = scmp.le.s32.totalorder 1, %s17
      %p209 = scmp.lt.s32.totalorder %s17, 3
      %p210 = pnand %p208, %p209
      %p211 = pneg %p210
      // Predicated region
      $region9: #{tpu_custom_call.1} parent=5 // pred_check
        _
      $region10: #{tpu_custom_call.1} parent=5 // pred_check_branch
        %213 = sbr.rel (%p210) target = $region12
      $region11: #{tpu_custom_call.1} parent=5 // pred_region
        %s214 = ssub.s32 %s17, 1
        // Predicated region
        $region13: #{tpu_custom_call.1} parent=11 // pred_check
          %p215 = pneg %p90
        $region14: #{tpu_custom_call.1} parent=11 // pred_check_branch
          %217 = sbr.rel (%p215) target = $region16
        $region15: #{tpu_custom_call.1} parent=11 // pred_region
          %s219 = ssub.s32 2048, 2048
          %220 = vsyncadd [#allocation3], %s219
          %s221 = sshll.u32 [#allocation2], 4
          %s222 = int_to_ptr.vmem [resolvable:$true] %s221
          %227 = dma.hbm_to_vmem [thread:$0]  %s2, 2048, %s222, [#allocation3], 128, 128, 8
        $region16: #{tpu_custom_call.1} parent=11 // pred_fallthru
          _
        // Predicated region
        $region17: #{tpu_custom_call.1} parent=11 // pred_check
          %p228 = pneg %p111
        $region18: #{tpu_custom_call.1} parent=11 // pred_check_branch
          %230 = sbr.rel (%p228) target = $region20
        $region19: #{tpu_custom_call.1} parent=11 // pred_region
          _
        $region20: #{tpu_custom_call.1} parent=11 // pred_fallthru
          _
        // Predicated region
        $region21: #{tpu_custom_call.1} parent=11 // pred_check
          %p231 = pneg %p132
        $region22: #{tpu_custom_call.1} parent=11 // pred_check_branch
          %233 = sbr.rel (%p231) target = $region24
        $region23: #{tpu_custom_call.1} parent=11 // pred_region
          _
        $region24: #{tpu_custom_call.1} parent=11 // pred_fallthru
          _
        // Predicated region
        $region25: #{tpu_custom_call.1} parent=11 // pred_check
          %p234 = pneg %p153
        $region26: #{tpu_custom_call.1} parent=11 // pred_check_branch
          %236 = sbr.rel (%p234) target = $region28
        $region27: #{tpu_custom_call.1} parent=11 // pred_region
          _
        $region28: #{tpu_custom_call.1} parent=11 // pred_fallthru
          _
        // Predicated region
        $region29: #{tpu_custom_call.1} parent=11 // pred_check
          %p237 = pneg %p174
        $region30: #{tpu_custom_call.1} parent=11 // pred_check_branch
          %239 = sbr.rel (%p237) target = $region32
        $region31: #{tpu_custom_call.1} parent=11 // pred_region
          _
        $region32: #{tpu_custom_call.1} parent=11 // pred_fallthru
          _
      $region12: #{tpu_custom_call.1} parent=5 // pred_fallthru
        _
      %p240 = scmp.lt.s32.totalorder %s17, 2
      // Predicated region
      $region33: #{tpu_custom_call.1} parent=5 // pred_check
        %p241 = pneg %p240
      $region34: #{tpu_custom_call.1} parent=5 // pred_check_branch
        %243 = sbr.rel (%p241) target = $region36
      $region35: #{tpu_custom_call.1} parent=5 // pred_region
        // Predicated region
        $region37: #{tpu_custom_call.1} parent=35 // pred_check
          %p244 = pneg %p37
        $region38: #{tpu_custom_call.1} parent=35 // pred_check_branch
          %246 = sbr.rel (%p244) target = $region40
        $region39: #{tpu_custom_call.1} parent=35 // pred_region
          %p247 = scmp.lt.s32.totalorder %s17, 1
          %s248 = scalar_select %p247, %s17, 1
          %s249 = smul.addr %s248, 16
          %s250 = smul.addr %s249, 8
          %s251 = scalar_lea.vmem %s0, %s250
        $region40: #{tpu_custom_call.1} parent=35 // pred_fallthru
          _
        // Predicated region
        $region41: #{tpu_custom_call.1} parent=35 // pred_check
          %p252 = pneg %p63
        $region42: #{tpu_custom_call.1} parent=35 // pred_check_branch
          %254 = sbr.rel (%p252) target = $region44
        $region43: #{tpu_custom_call.1} parent=35 // pred_region
          %s255 = smul.u32 16, %s17
          %p256 = scmp.lt.s32.totalorder %s255, 31
          %s257 = scalar_select %p256, %s255, 31
          %s258 = smul.addr %s257, 8
          %s259 = scalar_lea.vmem %s1, %s258
          %s260 = smul.u32 16, %s17
        $region44: #{tpu_custom_call.1} parent=35 // pred_fallthru
          _
      $region36: #{tpu_custom_call.1} parent=5 // pred_fallthru
        _
      %p261 = scmp.le.s32.totalorder 1, %s17
      %p262 = scmp.lt.s32.totalorder %s17, 3
      %p263 = pnand %p261, %p262
      %p264 = pneg %p263
      // Predicated region
      $region45: #{tpu_custom_call.1} parent=5 // pred_check
        _
      $region46: #{tpu_custom_call.1} parent=5 // pred_check_branch
        %266 = sbr.rel (%p263) target = $region48
      $region47: #{tpu_custom_call.1} parent=5 // pred_region
        %s267 = ssub.s32 %s17, 1
        // Predicated region
        $region49: #{tpu_custom_call.1} parent=47 // pred_check
          %p268 = pneg %p90
        $region50: #{tpu_custom_call.1} parent=47 // pred_check_branch
          %270 = sbr.rel (%p268) target = $region52
        $region51: #{tpu_custom_call.1} parent=47 // pred_region
          %271 = dma.done [#allocation3], 2048
        $region52: #{tpu_custom_call.1} parent=47 // pred_fallthru
          _
        %p272 = scmp.lt.s32.totalorder %s22, 1
        %s273 = scalar_select %p272, %s22, 1
        %s274 = smul.addr %s273, 16
        %s275 = smul.addr %s274, 8
        %s276 = scalar_lea.vmem %s0, %s275
        %p277 = pneg %p43
        %p278 = pneg %p40
        %s279 = smul.u32 16, %s22
        %p280 = scmp.lt.s32.totalorder %s279, 31
        %s281 = scalar_select %p280, %s279, 31
        %s282 = smul.addr %s281, 8
        %s283 = scalar_lea.vmem %s1, %s282
        %p284 = pneg %p69
        %p285 = pneg %p66
        %p286 = pneg %p90
        %p287 = pneg %p87
        %p288 = pneg %p111
        %p289 = pneg %p108
        %p290 = pneg %p132
        %p291 = pneg %p129
        %p292 = pneg %p153
        %p293 = pneg %p150
        %p294 = pneg %p174
        %p295 = pneg %p171
        %p296 = pneg %p200
        %p297 = pneg %p197
        %s298 = sand.u32 %s187, 1
        %s299 = scalar_lea.sflag [#allocation4], %s298
        %s300 = sand.u32 %s187, 1
        %s301 = scalar_lea.vmem [#allocation5], %s300
        %p302 = scmp.lt.s32.totalorder %s22, 1
        %s303 = scalar_select %p302, %s22, 1
        %s304 = smul.addr %s303, 16
        %s305 = smul.addr %s304, 8
        %s306 = scalar_lea.vmem %s0, %s305
        %s307 = smul.u32 16, %s22
        %p308 = scmp.lt.s32.totalorder %s307, 31
        %s309 = scalar_select %p308, %s307, 31
        %s310 = smul.addr %s309, 8
        %s311 = scalar_lea.vmem %s1, %s310
        %s312 = smul.u32 16, %s22
        %v313 = vld [vmem:[%s306] sm:$0xff]
        %v314 = vld [vmem:[%s306 + $0x8] sm:$0xff]
        %v315 = vld [vmem:[%s306 + $0x10] sm:$0xff]
        %v316 = vld [vmem:[%s306 + $0x18] sm:$0xff]
        %v317 = vld [vmem:[%s306 + $0x20] sm:$0xff]
        %v318 = vld [vmem:[%s306 + $0x28] sm:$0xff]
        %v319 = vld [vmem:[%s306 + $0x30] sm:$0xff]
        %v320 = vld [vmem:[%s306 + $0x38] sm:$0xff]
        %v321 = vld [vmem:[%s306 + $0x40] sm:$0xff]
        %v322 = vld [vmem:[%s306 + $0x48] sm:$0xff]
        %v323 = vld [vmem:[%s306 + $0x50] sm:$0xff]
        %v324 = vld [vmem:[%s306 + $0x58] sm:$0xff]
        %v325 = vld [vmem:[%s306 + $0x60] sm:$0xff]
        %v326 = vld [vmem:[%s306 + $0x68] sm:$0xff]
        %v327 = vld [vmem:[%s306 + $0x70] sm:$0xff]
        %v328 = vld [vmem:[%s306 + $0x78] sm:$0xff]
        %v329 = vld [vmem:[%s311] sm:$0xff]
        %v330 = vld [vmem:[%s311 + $0x8] sm:$0xff]
        %v331 = vld [vmem:[%s311 + $0x10] sm:$0xff]
        %v332 = vld [vmem:[%s311 + $0x18] sm:$0xff]
        %v333 = vld [vmem:[%s311 + $0x20] sm:$0xff]
        %v334 = vld [vmem:[%s311 + $0x28] sm:$0xff]
        %v335 = vld [vmem:[%s311 + $0x30] sm:$0xff]
        %v336 = vld [vmem:[%s311 + $0x38] sm:$0xff]
        %v337 = vld [vmem:[%s311 + $0x40] sm:$0xff]
        %v338 = vld [vmem:[%s311 + $0x48] sm:$0xff]
        %v339 = vld [vmem:[%s311 + $0x50] sm:$0xff]
        %v340 = vld [vmem:[%s311 + $0x58] sm:$0xff]
        %v341 = vld [vmem:[%s311 + $0x60] sm:$0xff]
        %v342 = vld [vmem:[%s311 + $0x68] sm:$0xff]
        %v343 = vld [vmem:[%s311 + $0x70] sm:$0xff]
        %v344 = vld [vmem:[%s311 + $0x78] sm:$0xff]
        %345 = vmatprep.subr.mxu0 0.0
        %346 = vmatpush1.msra.mxu0 %v344
        %347 = vmatprep.subr.mxu0 0.0
        %348 = vmatpush1.msra.mxu0 %v343
        %349 = vmatprep.subr.mxu0 0.0
        %350 = vmatpush1.msra.mxu0 %v342
        %351 = vmatprep.subr.mxu0 0.0
        %352 = vmatpush1.msra.mxu0 %v341
        %353 = vmatprep.subr.mxu0 0.0
        %354 = vmatpush1.msra.mxu0 %v340
        %355 = vmatprep.subr.mxu0 0.0
        %356 = vmatpush1.msra.mxu0 %v339
        %357 = vmatprep.subr.mxu0 0.0
        %358 = vmatpush1.msra.mxu0 %v338
        %359 = vmatprep.subr.mxu0 0.0
        %360 = vmatpush1.msra.mxu0 %v337
        %361 = vmatprep.subr.mxu0 0.0
        %362 = vmatpush1.msra.mxu0 %v336
        %363 = vmatprep.subr.mxu0 0.0
        %364 = vmatpush1.msra.mxu0 %v335
        %365 = vmatprep.subr.mxu0 0.0
        %366 = vmatpush1.msra.mxu0 %v334
        %367 = vmatprep.subr.mxu0 0.0
        %368 = vmatpush1.msra.mxu0 %v333
        %369 = vmatprep.subr.mxu0 0.0
        %370 = vmatpush1.msra.mxu0 %v332
        %371 = vmatprep.subr.mxu0 0.0
        %372 = vmatpush1.msra.mxu0 %v331
        %373 = vmatprep.subr.mxu0 0.0
        %374 = vmatpush1.msra.mxu0 %v330
        %375 = vmatprep.subr.mxu0 0.0
        %376 = vmatpush1.msra.mxu0 %v329
        %377 = vmatprep.subr.mxu0 0.0
        %378 = vmatpush2.msra.mxu0 0.0
        %379 = vmatprep.subr.mxu0 0.0
        %380 = vmatpush2.msra.mxu0 0.0
        %381 = vmatprep.subr.mxu0 0.0
        %382 = vmatpush2.msra.mxu0 0.0
        %383 = vmatprep.subr.mxu0 0.0
        %384 = vmatpush2.msra.mxu0 0.0
        %385 = vmatprep.subr.mxu0 0.0
        %386 = vmatpush2.msra.mxu0 0.0
        %387 = vmatprep.subr.mxu0 0.0
        %388 = vmatpush2.msra.mxu0 0.0
        %389 = vmatprep.subr.mxu0 0.0
        %390 = vmatpush2.msra.mxu0 0.0
        %391 = vmatprep.subr.mxu0 0.0
        %392 = vmatpush2.msra.mxu0 0.0
        %393 = vmatprep.subr.mxu0 0.0
        %394 = vmatpush2.msra.mxu0 0.0
        %395 = vmatprep.subr.mxu0 0.0
        %396 = vmatpush2.msra.mxu0 0.0
        %397 = vmatprep.subr.mxu0 0.0
        %398 = vmatpush2.msra.mxu0 0.0
        %399 = vmatprep.subr.mxu0 0.0
        %400 = vmatpush2.msra.mxu0 0.0
        %401 = vmatprep.subr.mxu0 0.0
        %402 = vmatpush2.msra.mxu0 0.0
        %403 = vmatprep.subr.mxu0 0.0
        %404 = vmatpush2.msra.mxu0 0.0
        %405 = vmatprep.subr.mxu0 0.0
        %406 = vmatpush2.msra.mxu0 0.0
        %407 = vmatprep.subr.mxu0 0.0
        %408 = vmatpush2.msra.mxu0 0.0
        %409 = vmatprep.mubr.f32.mxu0 0.0
        %410 = vmatmul.mubr.f32.gmra.mxu0 %v313
        %v411 = vpop.f32.mrf.mxu0
        %v412 = vadd.f32 0.0, %v411
        %v413 = vpop.f32.mrf.mxu0
        %414 = vmatprep.mubr.f32.mxu0 0.0
        %415 = vmatmul.mubr.f32.gmra.mxu0 %v314
        %v416 = vpop.f32.mrf.mxu0
        %v417 = vadd.f32 0.0, %v416
        %v418 = vpop.f32.mrf.mxu0
        %419 = vmatprep.mubr.f32.mxu0 0.0
        %420 = vmatmul.mubr.f32.gmra.mxu0 %v315
        %v421 = vpop.f32.mrf.mxu0
        %v422 = vadd.f32 0.0, %v421
        %v423 = vpop.f32.mrf.mxu0
        %424 = vmatprep.mubr.f32.mxu0 0.0
        %425 = vmatmul.mubr.f32.gmra.mxu0 %v316
        %v426 = vpop.f32.mrf.mxu0
        %v427 = vadd.f32 0.0, %v426
        %v428 = vpop.f32.mrf.mxu0
        %429 = vmatprep.mubr.f32.mxu0 0.0
        %430 = vmatmul.mubr.f32.gmra.mxu0 %v317
        %v431 = vpop.f32.mrf.mxu0
        %v432 = vadd.f32 0.0, %v431
        %v433 = vpop.f32.mrf.mxu0
        %434 = vmatprep.mubr.f32.mxu0 0.0
        %435 = vmatmul.mubr.f32.gmra.mxu0 %v318
        %v436 = vpop.f32.mrf.mxu0
        %v437 = vadd.f32 0.0, %v436
        %v438 = vpop.f32.mrf.mxu0
        %439 = vmatprep.mubr.f32.mxu0 0.0
        %440 = vmatmul.mubr.f32.gmra.mxu0 %v319
        %v441 = vpop.f32.mrf.mxu0
        %v442 = vadd.f32 0.0, %v441
        %v443 = vpop.f32.mrf.mxu0
        %444 = vmatprep.mubr.f32.mxu0 0.0
        %445 = vmatmul.mubr.f32.gmra.mxu0 %v320
        %v446 = vpop.f32.mrf.mxu0
        %v447 = vadd.f32 0.0, %v446
        %v448 = vpop.f32.mrf.mxu0
        %449 = vmatprep.mubr.f32.mxu0 0.0
        %450 = vmatmul.mubr.f32.gmra.mxu0 %v321
        %v451 = vpop.f32.mrf.mxu0
        %v452 = vadd.f32 0.0, %v451
        %v453 = vpop.f32.mrf.mxu0
        %454 = vmatprep.mubr.f32.mxu0 0.0
        %455 = vmatmul.mubr.f32.gmra.mxu0 %v322
        %v456 = vpop.f32.mrf.mxu0
        %v457 = vadd.f32 0.0, %v456
        %v458 = vpop.f32.mrf.mxu0
        %459 = vmatprep.mubr.f32.mxu0 0.0
        %460 = vmatmul.mubr.f32.gmra.mxu0 %v323
        %v461 = vpop.f32.mrf.mxu0
        %v462 = vadd.f32 0.0, %v461
        %v463 = vpop.f32.mrf.mxu0
        %464 = vmatprep.mubr.f32.mxu0 0.0
        %465 = vmatmul.mubr.f32.gmra.mxu0 %v324
        %v466 = vpop.f32.mrf.mxu0
        %v467 = vadd.f32 0.0, %v466
        %v468 = vpop.f32.mrf.mxu0
        %469 = vmatprep.mubr.f32.mxu0 0.0
        %470 = vmatmul.mubr.f32.gmra.mxu0 %v325
        %v471 = vpop.f32.mrf.mxu0
        %v472 = vadd.f32 0.0, %v471
        %v473 = vpop.f32.mrf.mxu0
        %474 = vmatprep.mubr.f32.mxu0 0.0
        %475 = vmatmul.mubr.f32.gmra.mxu0 %v326
        %v476 = vpop.f32.mrf.mxu0
        %v477 = vadd.f32 0.0, %v476
        %v478 = vpop.f32.mrf.mxu0
        %479 = vmatprep.mubr.f32.mxu0 0.0
        %480 = vmatmul.mubr.f32.gmra.mxu0 %v327
        %v481 = vpop.f32.mrf.mxu0
        %v482 = vadd.f32 0.0, %v481
        %v483 = vpop.f32.mrf.mxu0
        %484 = vmatprep.mubr.f32.mxu0 0.0
        %485 = vmatmul.mubr.f32.gmra.mxu0 %v328
        %v486 = vpop.f32.mrf.mxu0
        %v487 = vadd.f32 0.0, %v486
        %v488 = vpop.f32.mrf.mxu0
        %489 = vdwg.mxu0
        %506 = vrot.lane.b32.xlu0 %v412, 16
        %v507 = vpop.permute.xlu0 %506
        %508 = vrot.lane.b32.xlu0 %v417, 16
        %v509 = vpop.permute.xlu0 %508
        %510 = vrot.lane.b32.xlu0 %v422, 16
        %v511 = vpop.permute.xlu0 %510
        %512 = vrot.lane.b32.xlu0 %v427, 16
        %v513 = vpop.permute.xlu0 %512
        %514 = vrot.lane.b32.xlu0 %v432, 16
        %v515 = vpop.permute.xlu0 %514
        %516 = vrot.lane.b32.xlu0 %v437, 16
        %v517 = vpop.permute.xlu0 %516
        %518 = vrot.lane.b32.xlu0 %v442, 16
        %v519 = vpop.permute.xlu0 %518
        %520 = vrot.lane.b32.xlu0 %v447, 16
        %v521 = vpop.permute.xlu0 %520
        %522 = vrot.lane.b32.xlu0 %v452, 16
        %v523 = vpop.permute.xlu0 %522
        %524 = vrot.lane.b32.xlu0 %v457, 16
        %v525 = vpop.permute.xlu0 %524
        %526 = vrot.lane.b32.xlu0 %v462, 16
        %v527 = vpop.permute.xlu0 %526
        %528 = vrot.lane.b32.xlu0 %v467, 16
        %v529 = vpop.permute.xlu0 %528
        %530 = vrot.lane.b32.xlu0 %v472, 16
        %v531 = vpop.permute.xlu0 %530
        %532 = vrot.lane.b32.xlu0 %v477, 16
        %v533 = vpop.permute.xlu0 %532
        %534 = vrot.lane.b32.xlu0 %v482, 16
        %v535 = vpop.permute.xlu0 %534
        %536 = vrot.lane.b32.xlu0 %v487, 16
        %v537 = vpop.permute.xlu0 %536
        %vm554 = vcmask 130048
        %v555 = vsel %vm554, %v329, %v507
        %v556 = vsel %vm554, %v330, %v509
        %v557 = vsel %vm554, %v331, %v511
        %v558 = vsel %vm554, %v332, %v513
        %v559 = vsel %vm554, %v333, %v515
        %v560 = vsel %vm554, %v334, %v517
        %v561 = vsel %vm554, %v335, %v519
        %v562 = vsel %vm554, %v336, %v521
        %v563 = vsel %vm554, %v337, %v523
        %v564 = vsel %vm554, %v338, %v525
        %v565 = vsel %vm554, %v339, %v527
        %v566 = vsel %vm554, %v340, %v529
        %v567 = vsel %vm554, %v341, %v531
        %v568 = vsel %vm554, %v342, %v533
        %v569 = vsel %vm554, %v343, %v535
        %v570 = vsel %vm554, %v344, %v537
        %v571 = vld [vmem:[%s3] sm:$0xff]
        %v572 = vld [vmem:[%s3 + $0x8] sm:$0xff]
        %v573 = vld [vmem:[%s3 + $0x10] sm:$0xff]
        %v574 = vld [vmem:[%s3 + $0x18] sm:$0xff]
        %v575 = vld [vmem:[%s4] sm:$0x1]
        %v577 = vlaneseq
        %v578 = vshrl.u32 %v577, 7
        %v579 = vsub.s32 0, %v578
        %v580 = vrot.slane %v575, %v579
        %vm582 = vcmask 261120
        %v584 = vsel %vm582, %v555, 0
        %v587 = vsel %vm582, %v556, 0
        %v590 = vsel %vm582, %v557, 0
        %v593 = vsel %vm582, %v558, 0
        %v596 = vsel %vm582, %v559, 0
        %v599 = vsel %vm582, %v560, 0
        %v602 = vsel %vm582, %v561, 0
        %v605 = vsel %vm582, %v562, 0
        %v608 = vsel %vm582, %v563, 0
        %v611 = vsel %vm582, %v564, 0
        %v614 = vsel %vm582, %v565, 0
        %v617 = vsel %vm582, %v566, 0
        %v620 = vsel %vm582, %v567, 0
        %v623 = vsel %vm582, %v568, 0
        %v626 = vsel %vm582, %v569, 0
        %v629 = vsel %vm582, %v570, 0
        %631 = vmatprep.subr.mxu0 0.0
        %632 = vmatpush1.msra.mxu0 0.0
        %633 = vmatprep.subr.mxu0 0.0
        %634 = vmatpush1.msra.mxu0 0.0
        %635 = vmatprep.subr.mxu0 0.0
        %636 = vmatpush1.msra.mxu0 0.0
        %637 = vmatprep.subr.mxu0 0.0
        %638 = vmatpush1.msra.mxu0 0.0
        %639 = vmatprep.subr.mxu0 0.0
        %640 = vmatpush1.msra.mxu0 0.0
        %641 = vmatprep.subr.mxu0 0.0
        %642 = vmatpush1.msra.mxu0 0.0
        %643 = vmatprep.subr.mxu0 0.0
        %644 = vmatpush1.msra.mxu0 0.0
        %645 = vmatprep.subr.mxu0 0.0
        %646 = vmatpush1.msra.mxu0 0.0
        %647 = vmatprep.subr.mxu0 0.0
        %648 = vmatpush1.msra.mxu0 0.0
        %649 = vmatprep.subr.mxu0 0.0
        %650 = vmatpush1.msra.mxu0 0.0
        %651 = vmatprep.subr.mxu0 0.0
        %652 = vmatpush1.msra.mxu0 0.0
        %653 = vmatprep.subr.mxu0 0.0
        %654 = vmatpush1.msra.mxu0 0.0
        %655 = vmatprep.subr.mxu0 0.0
        %656 = vmatpush1.msra.mxu0 %v574
        %657 = vmatprep.subr.mxu0 0.0
        %658 = vmatpush1.msra.mxu0 %v573
        %659 = vmatprep.subr.mxu0 0.0
        %660 = vmatpush1.msra.mxu0 %v572
        %661 = vmatprep.subr.mxu0 0.0
        %662 = vmatpush1.msra.mxu0 %v571
        %663 = vmatprep.subr.mxu0 0.0
        %664 = vmatpush2.msra.mxu0 0.0
        %665 = vmatprep.subr.mxu0 0.0
        %666 = vmatpush2.msra.mxu0 0.0
        %667 = vmatprep.subr.mxu0 0.0
        %668 = vmatpush2.msra.mxu0 0.0
        %669 = vmatprep.subr.mxu0 0.0
        %670 = vmatpush2.msra.mxu0 0.0
        %671 = vmatprep.subr.mxu0 0.0
        %672 = vmatpush2.msra.mxu0 0.0
        %673 = vmatprep.subr.mxu0 0.0
        %674 = vmatpush2.msra.mxu0 0.0
        %675 = vmatprep.subr.mxu0 0.0
        %676 = vmatpush2.msra.mxu0 0.0
        %677 = vmatprep.subr.mxu0 0.0
        %678 = vmatpush2.msra.mxu0 0.0
        %679 = vmatprep.subr.mxu0 0.0
        %680 = vmatpush2.msra.mxu0 0.0
        %681 = vmatprep.subr.mxu0 0.0
        %682 = vmatpush2.msra.mxu0 0.0
        %683 = vmatprep.subr.mxu0 0.0
        %684 = vmatpush2.msra.mxu0 0.0
        %685 = vmatprep.subr.mxu0 0.0
        %686 = vmatpush2.msra.mxu0 0.0
        %687 = vmatprep.subr.mxu0 0.0
        %688 = vmatpush2.msra.mxu0 0.0
        %689 = vmatprep.subr.mxu0 0.0
        %690 = vmatpush2.msra.mxu0 0.0
        %691 = vmatprep.subr.mxu0 0.0
        %692 = vmatpush2.msra.mxu0 0.0
        %693 = vmatprep.subr.mxu0 0.0
        %694 = vmatpush2.msra.mxu0 0.0
        %695 = vmatprep.mubr.f32.mxu0 0.0
        %696 = vmatmul.mubr.f32.gmra.mxu0 %v584
        %v697 = vpop.f32.mrf.mxu0
        %v698 = vadd.f32 %v580, %v697
        %v699 = vpop.f32.mrf.mxu0
        %700 = vmatprep.mubr.f32.mxu0 0.0
        %701 = vmatmul.mubr.f32.gmra.mxu0 %v587
        %v702 = vpop.f32.mrf.mxu0
        %v703 = vadd.f32 %v580, %v702
        %v704 = vpop.f32.mrf.mxu0
        %705 = vmatprep.mubr.f32.mxu0 0.0
        %706 = vmatmul.mubr.f32.gmra.mxu0 %v590
        %v707 = vpop.f32.mrf.mxu0
        %v708 = vadd.f32 %v580, %v707
        %v709 = vpop.f32.mrf.mxu0
        %710 = vmatprep.mubr.f32.mxu0 0.0
        %711 = vmatmul.mubr.f32.gmra.mxu0 %v593
        %v712 = vpop.f32.mrf.mxu0
        %v713 = vadd.f32 %v580, %v712
        %v714 = vpop.f32.mrf.mxu0
        %715 = vmatprep.mubr.f32.mxu0 0.0
        %716 = vmatmul.mubr.f32.gmra.mxu0 %v596
        %v717 = vpop.f32.mrf.mxu0
        %v718 = vadd.f32 %v580, %v717
        %v719 = vpop.f32.mrf.mxu0
        %720 = vmatprep.mubr.f32.mxu0 0.0
        %721 = vmatmul.mubr.f32.gmra.mxu0 %v599
        %v722 = vpop.f32.mrf.mxu0
        %v723 = vadd.f32 %v580, %v722
        %v724 = vpop.f32.mrf.mxu0
        %725 = vmatprep.mubr.f32.mxu0 0.0
        %726 = vmatmul.mubr.f32.gmra.mxu0 %v602
        %v727 = vpop.f32.mrf.mxu0
        %v728 = vadd.f32 %v580, %v727
        %v729 = vpop.f32.mrf.mxu0
        %730 = vmatprep.mubr.f32.mxu0 0.0
        %731 = vmatmul.mubr.f32.gmra.mxu0 %v605
        %v732 = vpop.f32.mrf.mxu0
        %v733 = vadd.f32 %v580, %v732
        %v734 = vpop.f32.mrf.mxu0
        %735 = vmatprep.mubr.f32.mxu0 0.0
        %736 = vmatmul.mubr.f32.gmra.mxu0 %v608
        %v737 = vpop.f32.mrf.mxu0
        %v738 = vadd.f32 %v580, %v737
        %v739 = vpop.f32.mrf.mxu0
        %740 = vmatprep.mubr.f32.mxu0 0.0
        %741 = vmatmul.mubr.f32.gmra.mxu0 %v611
        %v742 = vpop.f32.mrf.mxu0
        %v743 = vadd.f32 %v580, %v742
        %v744 = vpop.f32.mrf.mxu0
        %745 = vmatprep.mubr.f32.mxu0 0.0
        %746 = vmatmul.mubr.f32.gmra.mxu0 %v614
        %v747 = vpop.f32.mrf.mxu0
        %v748 = vadd.f32 %v580, %v747
        %v749 = vpop.f32.mrf.mxu0
        %750 = vmatprep.mubr.f32.mxu0 0.0
        %751 = vmatmul.mubr.f32.gmra.mxu0 %v617
        %v752 = vpop.f32.mrf.mxu0
        %v753 = vadd.f32 %v580, %v752
        %v754 = vpop.f32.mrf.mxu0
        %755 = vmatprep.mubr.f32.mxu0 0.0
        %756 = vmatmul.mubr.f32.gmra.mxu0 %v620
        %v757 = vpop.f32.mrf.mxu0
        %v758 = vadd.f32 %v580, %v757
        %v759 = vpop.f32.mrf.mxu0
        %760 = vmatprep.mubr.f32.mxu0 0.0
        %761 = vmatmul.mubr.f32.gmra.mxu0 %v623
        %v762 = vpop.f32.mrf.mxu0
        %v763 = vadd.f32 %v580, %v762
        %v764 = vpop.f32.mrf.mxu0
        %765 = vmatprep.mubr.f32.mxu0 0.0
        %766 = vmatmul.mubr.f32.gmra.mxu0 %v626
        %v767 = vpop.f32.mrf.mxu0
        %v768 = vadd.f32 %v580, %v767
        %v769 = vpop.f32.mrf.mxu0
        %770 = vmatprep.mubr.f32.mxu0 0.0
        %771 = vmatmul.mubr.f32.gmra.mxu0 %v629
        %v772 = vpop.f32.mrf.mxu0
        %v773 = vadd.f32 %v580, %v772
        %v774 = vpop.f32.mrf.mxu0
        %775 = vdwg.mxu0
        %v776 = vmax.f32 %v698, 0.0
        %v777 = vmax.f32 %v703, 0.0
        %v778 = vmax.f32 %v708, 0.0
        %v779 = vmax.f32 %v713, 0.0
        %v780 = vmax.f32 %v718, 0.0
        %v781 = vmax.f32 %v723, 0.0
        %v782 = vmax.f32 %v728, 0.0
        %v783 = vmax.f32 %v733, 0.0
        %v784 = vmax.f32 %v738, 0.0
        %v785 = vmax.f32 %v743, 0.0
        %v786 = vmax.f32 %v748, 0.0
        %v787 = vmax.f32 %v753, 0.0
        %v788 = vmax.f32 %v758, 0.0
        %v789 = vmax.f32 %v763, 0.0
        %v790 = vmax.f32 %v768, 0.0
        %v791 = vmax.f32 %v773, 0.0
        %792 = vmatprep.subr.mxu0 0.0
        %793 = vmatpush1.msra.mxu0 %v791
        %794 = vmatprep.subr.mxu0 0.0
        %795 = vmatpush1.msra.mxu0 %v790
        %796 = vmatprep.subr.mxu0 0.0
        %797 = vmatpush1.msra.mxu0 %v789
        %798 = vmatprep.subr.mxu0 0.0
        %799 = vmatpush1.msra.mxu0 %v788
        %800 = vmatprep.subr.mxu0 0.0
        %801 = vmatpush1.msra.mxu0 %v787
        %802 = vmatprep.subr.mxu0 0.0
        %803 = vmatpush1.msra.mxu0 %v786
        %804 = vmatprep.subr.mxu0 0.0
        %805 = vmatpush1.msra.mxu0 %v785
        %806 = vmatprep.subr.mxu0 0.0
        %807 = vmatpush1.msra.mxu0 %v784
        %808 = vmatprep.subr.mxu0 0.0
        %809 = vmatpush1.msra.mxu0 %v783
        %810 = vmatprep.subr.mxu0 0.0
        %811 = vmatpush1.msra.mxu0 %v782
        %812 = vmatprep.subr.mxu0 0.0
        %813 = vmatpush1.msra.mxu0 %v781
        %814 = vmatprep.subr.mxu0 0.0
        %815 = vmatpush1.msra.mxu0 %v780
        %816 = vmatprep.subr.mxu0 0.0
        %817 = vmatpush1.msra.mxu0 %v779
        %818 = vmatprep.subr.mxu0 0.0
        %819 = vmatpush1.msra.mxu0 %v778
        %820 = vmatprep.subr.mxu0 0.0
        %821 = vmatpush1.msra.mxu0 %v777
        %822 = vmatprep.subr.mxu0 0.0
        %823 = vmatpush1.msra.mxu0 %v776
        %824 = vmatprep.subr.mxu0 0.0
        %825 = vmatpush2.msra.mxu0 0.0
        %826 = vmatprep.subr.mxu0 0.0
        %827 = vmatpush2.msra.mxu0 0.0
        %828 = vmatprep.subr.mxu0 0.0
        %829 = vmatpush2.msra.mxu0 0.0
        %830 = vmatprep.subr.mxu0 0.0
        %831 = vmatpush2.msra.mxu0 0.0
        %832 = vmatprep.subr.mxu0 0.0
        %833 = vmatpush2.msra.mxu0 0.0
        %834 = vmatprep.subr.mxu0 0.0
        %835 = vmatpush2.msra.mxu0 0.0
        %836 = vmatprep.subr.mxu0 0.0
        %837 = vmatpush2.msra.mxu0 0.0
        %838 = vmatprep.subr.mxu0 0.0
        %839 = vmatpush2.msra.mxu0 0.0
        %840 = vmatprep.subr.mxu0 0.0
        %841 = vmatpush2.msra.mxu0 0.0
        %842 = vmatprep.subr.mxu0 0.0
        %843 = vmatpush2.msra.mxu0 0.0
        %844 = vmatprep.subr.mxu0 0.0
        %845 = vmatpush2.msra.mxu0 0.0
        %846 = vmatprep.subr.mxu0 0.0
        %847 = vmatpush2.msra.mxu0 0.0
        %848 = vmatprep.subr.mxu0 0.0
        %849 = vmatpush2.msra.mxu0 0.0
        %850 = vmatprep.subr.mxu0 0.0
        %851 = vmatpush2.msra.mxu0 0.0
        %852 = vmatprep.subr.mxu0 0.0
        %853 = vmatpush2.msra.mxu0 0.0
        %854 = vmatprep.subr.mxu0 0.0
        %855 = vmatpush2.msra.mxu0 0.0
        %856 = vmatprep.mubr.f32.mxu0 0.0
        %857 = vmatmul.mubr.f32.gmra.mxu0 %v313
        %v858 = vpop.f32.mrf.mxu0
        %v859 = vadd.f32 0.0, %v858
        %v860 = vpop.f32.mrf.mxu0
        %861 = vmatprep.mubr.f32.mxu0 0.0
        %862 = vmatmul.mubr.f32.gmra.mxu0 %v314
        %v863 = vpop.f32.mrf.mxu0
        %v864 = vadd.f32 0.0, %v863
        %v865 = vpop.f32.mrf.mxu0
        %866 = vmatprep.mubr.f32.mxu0 0.0
        %867 = vmatmul.mubr.f32.gmra.mxu0 %v315
        %v868 = vpop.f32.mrf.mxu0
        %v869 = vadd.f32 0.0, %v868
        %v870 = vpop.f32.mrf.mxu0
        %871 = vmatprep.mubr.f32.mxu0 0.0
        %872 = vmatmul.mubr.f32.gmra.mxu0 %v316
        %v873 = vpop.f32.mrf.mxu0
        %v874 = vadd.f32 0.0, %v873
        %v875 = vpop.f32.mrf.mxu0
        %876 = vmatprep.mubr.f32.mxu0 0.0
        %877 = vmatmul.mubr.f32.gmra.mxu0 %v317
        %v878 = vpop.f32.mrf.mxu0
        %v879 = vadd.f32 0.0, %v878
        %v880 = vpop.f32.mrf.mxu0
        %881 = vmatprep.mubr.f32.mxu0 0.0
        %882 = vmatmul.mubr.f32.gmra.mxu0 %v318
        %v883 = vpop.f32.mrf.mxu0
        %v884 = vadd.f32 0.0, %v883
        %v885 = vpop.f32.mrf.mxu0
        %886 = vmatprep.mubr.f32.mxu0 0.0
        %887 = vmatmul.mubr.f32.gmra.mxu0 %v319
        %v888 = vpop.f32.mrf.mxu0
        %v889 = vadd.f32 0.0, %v888
        %v890 = vpop.f32.mrf.mxu0
        %891 = vmatprep.mubr.f32.mxu0 0.0
        %892 = vmatmul.mubr.f32.gmra.mxu0 %v320
        %v893 = vpop.f32.mrf.mxu0
        %v894 = vadd.f32 0.0, %v893
        %v895 = vpop.f32.mrf.mxu0
        %896 = vmatprep.mubr.f32.mxu0 0.0
        %897 = vmatmul.mubr.f32.gmra.mxu0 %v321
        %v898 = vpop.f32.mrf.mxu0
        %v899 = vadd.f32 0.0, %v898
        %v900 = vpop.f32.mrf.mxu0
        %901 = vmatprep.mubr.f32.mxu0 0.0
        %902 = vmatmul.mubr.f32.gmra.mxu0 %v322
        %v903 = vpop.f32.mrf.mxu0
        %v904 = vadd.f32 0.0, %v903
        %v905 = vpop.f32.mrf.mxu0
        %906 = vmatprep.mubr.f32.mxu0 0.0
        %907 = vmatmul.mubr.f32.gmra.mxu0 %v323
        %v908 = vpop.f32.mrf.mxu0
        %v909 = vadd.f32 0.0, %v908
        %v910 = vpop.f32.mrf.mxu0
        %911 = vmatprep.mubr.f32.mxu0 0.0
        %912 = vmatmul.mubr.f32.gmra.mxu0 %v324
        %v913 = vpop.f32.mrf.mxu0
        %v914 = vadd.f32 0.0, %v913
        %v915 = vpop.f32.mrf.mxu0
        %916 = vmatprep.mubr.f32.mxu0 0.0
        %917 = vmatmul.mubr.f32.gmra.mxu0 %v325
        %v918 = vpop.f32.mrf.mxu0
        %v919 = vadd.f32 0.0, %v918
        %v920 = vpop.f32.mrf.mxu0
        %921 = vmatprep.mubr.f32.mxu0 0.0
        %922 = vmatmul.mubr.f32.gmra.mxu0 %v326
        %v923 = vpop.f32.mrf.mxu0
        %v924 = vadd.f32 0.0, %v923
        %v925 = vpop.f32.mrf.mxu0
        %926 = vmatprep.mubr.f32.mxu0 0.0
        %927 = vmatmul.mubr.f32.gmra.mxu0 %v327
        %v928 = vpop.f32.mrf.mxu0
        %v929 = vadd.f32 0.0, %v928
        %v930 = vpop.f32.mrf.mxu0
        %931 = vmatprep.mubr.f32.mxu0 0.0
        %932 = vmatmul.mubr.f32.gmra.mxu0 %v328
        %v933 = vpop.f32.mrf.mxu0
        %v934 = vadd.f32 0.0, %v933
        %v935 = vpop.f32.mrf.mxu0
        %936 = vdwg.mxu0
        %953 = vrot.lane.b32.xlu0 %v859, 32
        %v954 = vpop.permute.xlu0 %953
        %955 = vrot.lane.b32.xlu0 %v864, 32
        %v956 = vpop.permute.xlu0 %955
        %957 = vrot.lane.b32.xlu0 %v869, 32
        %v958 = vpop.permute.xlu0 %957
        %959 = vrot.lane.b32.xlu0 %v874, 32
        %v960 = vpop.permute.xlu0 %959
        %961 = vrot.lane.b32.xlu0 %v879, 32
        %v962 = vpop.permute.xlu0 %961
        %963 = vrot.lane.b32.xlu0 %v884, 32
        %v964 = vpop.permute.xlu0 %963
        %965 = vrot.lane.b32.xlu0 %v889, 32
        %v966 = vpop.permute.xlu0 %965
        %967 = vrot.lane.b32.xlu0 %v894, 32
        %v968 = vpop.permute.xlu0 %967
        %969 = vrot.lane.b32.xlu0 %v899, 32
        %v970 = vpop.permute.xlu0 %969
        %971 = vrot.lane.b32.xlu0 %v904, 32
        %v972 = vpop.permute.xlu0 %971
        %973 = vrot.lane.b32.xlu0 %v909, 32
        %v974 = vpop.permute.xlu0 %973
        %975 = vrot.lane.b32.xlu0 %v914, 32
        %v976 = vpop.permute.xlu0 %975
        %977 = vrot.lane.b32.xlu0 %v919, 32
        %v978 = vpop.permute.xlu0 %977
        %979 = vrot.lane.b32.xlu0 %v924, 32
        %v980 = vpop.permute.xlu0 %979
        %981 = vrot.lane.b32.xlu0 %v929, 32
        %v982 = vpop.permute.xlu0 %981
        %983 = vrot.lane.b32.xlu0 %v934, 32
        %v984 = vpop.permute.xlu0 %983
        %v1001 = vsel %vm582, %v776, %v954
        %v1002 = vsel %vm582, %v777, %v956
        %v1003 = vsel %vm582, %v778, %v958
        %v1004 = vsel %vm582, %v779, %v960
        %v1005 = vsel %vm582, %v780, %v962
        %v1006 = vsel %vm582, %v781, %v964
        %v1007 = vsel %vm582, %v782, %v966
        %v1008 = vsel %vm582, %v783, %v968
        %v1009 = vsel %vm582, %v784, %v970
        %v1010 = vsel %vm582, %v785, %v972
        %v1011 = vsel %vm582, %v786, %v974
        %v1012 = vsel %vm582, %v787, %v976
        %v1013 = vsel %vm582, %v788, %v978
        %v1014 = vsel %vm582, %v789, %v980
        %v1015 = vsel %vm582, %v790, %v982
        %v1016 = vsel %vm582, %v791, %v984
        %v1017 = vld [vmem:[%s5] sm:$0xff]
        %v1018 = vld [vmem:[%s5 + $0x8] sm:$0xff]
        %v1019 = vld [vmem:[%s5 + $0x10] sm:$0xff]
        %v1020 = vld [vmem:[%s5 + $0x18] sm:$0xff]
        %v1021 = vld [vmem:[%s5 + $0x20] sm:$0xff]
        %v1022 = vld [vmem:[%s5 + $0x28] sm:$0xff]
        %v1023 = vld [vmem:[%s5 + $0x30] sm:$0xff]
        %v1024 = vld [vmem:[%s5 + $0x38] sm:$0xff]
        %v1025 = vld [vmem:[%s6] sm:$0x1]
        %v1027 = vlaneseq
        %v1028 = vshrl.u32 %v1027, 7
        %v1029 = vsub.s32 0, %v1028
        %v1030 = vrot.slane %v1025, %v1029
        %vm1032 = vcmask 523264
        %v1034 = vsel %vm1032, %v1001, 0
        %v1037 = vsel %vm1032, %v1002, 0
        %v1040 = vsel %vm1032, %v1003, 0
        %v1043 = vsel %vm1032, %v1004, 0
        %v1046 = vsel %vm1032, %v1005, 0
        %v1049 = vsel %vm1032, %v1006, 0
        %v1052 = vsel %vm1032, %v1007, 0
        %v1055 = vsel %vm1032, %v1008, 0
        %v1058 = vsel %vm1032, %v1009, 0
        %v1061 = vsel %vm1032, %v1010, 0
        %v1064 = vsel %vm1032, %v1011, 0
        %v1067 = vsel %vm1032, %v1012, 0
        %v1070 = vsel %vm1032, %v1013, 0
        %v1073 = vsel %vm1032, %v1014, 0
        %v1076 = vsel %vm1032, %v1015, 0
        %v1079 = vsel %vm1032, %v1016, 0
        %1081 = vmatprep.subr.mxu0 0.0
        %1082 = vmatpush1.msra.mxu0 0.0
        %1083 = vmatprep.subr.mxu0 0.0
        %1084 = vmatpush1.msra.mxu0 0.0
        %1085 = vmatprep.subr.mxu0 0.0
        %1086 = vmatpush1.msra.mxu0 0.0
        %1087 = vmatprep.subr.mxu0 0.0
        %1088 = vmatpush1.msra.mxu0 0.0
        %1089 = vmatprep.subr.mxu0 0.0
        %1090 = vmatpush1.msra.mxu0 0.0
        %1091 = vmatprep.subr.mxu0 0.0
        %1092 = vmatpush1.msra.mxu0 0.0
        %1093 = vmatprep.subr.mxu0 0.0
        %1094 = vmatpush1.msra.mxu0 0.0
        %1095 = vmatprep.subr.mxu0 0.0
        %1096 = vmatpush1.msra.mxu0 0.0
        %1097 = vmatprep.subr.mxu0 0.0
        %1098 = vmatpush1.msra.mxu0 %v1024
        %1099 = vmatprep.subr.mxu0 0.0
        %1100 = vmatpush1.msra.mxu0 %v1023
        %1101 = vmatprep.subr.mxu0 0.0
        %1102 = vmatpush1.msra.mxu0 %v1022
        %1103 = vmatprep.subr.mxu0 0.0
        %1104 = vmatpush1.msra.mxu0 %v1021
        %1105 = vmatprep.subr.mxu0 0.0
        %1106 = vmatpush1.msra.mxu0 %v1020
        %1107 = vmatprep.subr.mxu0 0.0
        %1108 = vmatpush1.msra.mxu0 %v1019
        %1109 = vmatprep.subr.mxu0 0.0
        %1110 = vmatpush1.msra.mxu0 %v1018
        %1111 = vmatprep.subr.mxu0 0.0
        %1112 = vmatpush1.msra.mxu0 %v1017
        %1113 = vmatprep.subr.mxu0 0.0
        %1114 = vmatpush2.msra.mxu0 0.0
        %1115 = vmatprep.subr.mxu0 0.0
        %1116 = vmatpush2.msra.mxu0 0.0
        %1117 = vmatprep.subr.mxu0 0.0
        %1118 = vmatpush2.msra.mxu0 0.0
        %1119 = vmatprep.subr.mxu0 0.0
        %1120 = vmatpush2.msra.mxu0 0.0
        %1121 = vmatprep.subr.mxu0 0.0
        %1122 = vmatpush2.msra.mxu0 0.0
        %1123 = vmatprep.subr.mxu0 0.0
        %1124 = vmatpush2.msra.mxu0 0.0
        %1125 = vmatprep.subr.mxu0 0.0
        %1126 = vmatpush2.msra.mxu0 0.0
        %1127 = vmatprep.subr.mxu0 0.0
        %1128 = vmatpush2.msra.mxu0 0.0
        %1129 = vmatprep.subr.mxu0 0.0
        %1130 = vmatpush2.msra.mxu0 0.0
        %1131 = vmatprep.subr.mxu0 0.0
        %1132 = vmatpush2.msra.mxu0 0.0
        %1133 = vmatprep.subr.mxu0 0.0
        %1134 = vmatpush2.msra.mxu0 0.0
        %1135 = vmatprep.subr.mxu0 0.0
        %1136 = vmatpush2.msra.mxu0 0.0
        %1137 = vmatprep.subr.mxu0 0.0
        %1138 = vmatpush2.msra.mxu0 0.0
        %1139 = vmatprep.subr.mxu0 0.0
        %1140 = vmatpush2.msra.mxu0 0.0
        %1141 = vmatprep.subr.mxu0 0.0
        %1142 = vmatpush2.msra.mxu0 0.0
        %1143 = vmatprep.subr.mxu0 0.0
        %1144 = vmatpush2.msra.mxu0 0.0
        %1145 = vmatprep.mubr.f32.mxu0 0.0
        %1146 = vmatmul.mubr.f32.gmra.mxu0 %v1034
        %v1147 = vpop.f32.mrf.mxu0
        %v1148 = vadd.f32 %v1030, %v1147
        %v1149 = vpop.f32.mrf.mxu0
        %1150 = vmatprep.mubr.f32.mxu0 0.0
        %1151 = vmatmul.mubr.f32.gmra.mxu0 %v1037
        %v1152 = vpop.f32.mrf.mxu0
        %v1153 = vadd.f32 %v1030, %v1152
        %v1154 = vpop.f32.mrf.mxu0
        %1155 = vmatprep.mubr.f32.mxu0 0.0
        %1156 = vmatmul.mubr.f32.gmra.mxu0 %v1040
        %v1157 = vpop.f32.mrf.mxu0
        %v1158 = vadd.f32 %v1030, %v1157
        %v1159 = vpop.f32.mrf.mxu0
        %1160 = vmatprep.mubr.f32.mxu0 0.0
        %1161 = vmatmul.mubr.f32.gmra.mxu0 %v1043
        %v1162 = vpop.f32.mrf.mxu0
        %v1163 = vadd.f32 %v1030, %v1162
        %v1164 = vpop.f32.mrf.mxu0
        %1165 = vmatprep.mubr.f32.mxu0 0.0
        %1166 = vmatmul.mubr.f32.gmra.mxu0 %v1046
        %v1167 = vpop.f32.mrf.mxu0
        %v1168 = vadd.f32 %v1030, %v1167
        %v1169 = vpop.f32.mrf.mxu0
        %1170 = vmatprep.mubr.f32.mxu0 0.0
        %1171 = vmatmul.mubr.f32.gmra.mxu0 %v1049
        %v1172 = vpop.f32.mrf.mxu0
        %v1173 = vadd.f32 %v1030, %v1172
        %v1174 = vpop.f32.mrf.mxu0
        %1175 = vmatprep.mubr.f32.mxu0 0.0
        %1176 = vmatmul.mubr.f32.gmra.mxu0 %v1052
        %v1177 = vpop.f32.mrf.mxu0
        %v1178 = vadd.f32 %v1030, %v1177
        %v1179 = vpop.f32.mrf.mxu0
        %1180 = vmatprep.mubr.f32.mxu0 0.0
        %1181 = vmatmul.mubr.f32.gmra.mxu0 %v1055
        %v1182 = vpop.f32.mrf.mxu0
        %v1183 = vadd.f32 %v1030, %v1182
        %v1184 = vpop.f32.mrf.mxu0
        %1185 = vmatprep.mubr.f32.mxu0 0.0
        %1186 = vmatmul.mubr.f32.gmra.mxu0 %v1058
        %v1187 = vpop.f32.mrf.mxu0
        %v1188 = vadd.f32 %v1030, %v1187
        %v1189 = vpop.f32.mrf.mxu0
        %1190 = vmatprep.mubr.f32.mxu0 0.0
        %1191 = vmatmul.mubr.f32.gmra.mxu0 %v1061
        %v1192 = vpop.f32.mrf.mxu0
        %v1193 = vadd.f32 %v1030, %v1192
        %v1194 = vpop.f32.mrf.mxu0
        %1195 = vmatprep.mubr.f32.mxu0 0.0
        %1196 = vmatmul.mubr.f32.gmra.mxu0 %v1064
        %v1197 = vpop.f32.mrf.mxu0
        %v1198 = vadd.f32 %v1030, %v1197
        %v1199 = vpop.f32.mrf.mxu0
        %1200 = vmatprep.mubr.f32.mxu0 0.0
        %1201 = vmatmul.mubr.f32.gmra.mxu0 %v1067
        %v1202 = vpop.f32.mrf.mxu0
        %v1203 = vadd.f32 %v1030, %v1202
        %v1204 = vpop.f32.mrf.mxu0
        %1205 = vmatprep.mubr.f32.mxu0 0.0
        %1206 = vmatmul.mubr.f32.gmra.mxu0 %v1070
        %v1207 = vpop.f32.mrf.mxu0
        %v1208 = vadd.f32 %v1030, %v1207
        %v1209 = vpop.f32.mrf.mxu0
        %1210 = vmatprep.mubr.f32.mxu0 0.0
        %1211 = vmatmul.mubr.f32.gmra.mxu0 %v1073
        %v1212 = vpop.f32.mrf.mxu0
        %v1213 = vadd.f32 %v1030, %v1212
        %v1214 = vpop.f32.mrf.mxu0
        %1215 = vmatprep.mubr.f32.mxu0 0.0
        %1216 = vmatmul.mubr.f32.gmra.mxu0 %v1076
        %v1217 = vpop.f32.mrf.mxu0
        %v1218 = vadd.f32 %v1030, %v1217
        %v1219 = vpop.f32.mrf.mxu0
        %1220 = vmatprep.mubr.f32.mxu0 0.0
        %1221 = vmatmul.mubr.f32.gmra.mxu0 %v1079
        %v1222 = vpop.f32.mrf.mxu0
        %v1223 = vadd.f32 %v1030, %v1222
        %v1224 = vpop.f32.mrf.mxu0
        %1225 = vdwg.mxu0
        %v1226 = vlaneseq
        %v1227 = vand.u32 %v1226, 127
        %vm1228 = vcmp.eq.s32.totalorder %v1227, 16
        %v1229 = vsel %vm1228, %v1148, 0.0
        %v1230 = vsel %vm1228, %v1153, 0.0
        %v1231 = vsel %vm1228, %v1158, 0.0
        %v1232 = vsel %vm1228, %v1163, 0.0
        %v1233 = vsel %vm1228, %v1168, 0.0
        %v1234 = vsel %vm1228, %v1173, 0.0
        %v1235 = vsel %vm1228, %v1178, 0.0
        %v1236 = vsel %vm1228, %v1183, 0.0
        %v1237 = vsel %vm1228, %v1188, 0.0
        %v1238 = vsel %vm1228, %v1193, 0.0
        %v1239 = vsel %vm1228, %v1198, 0.0
        %v1240 = vsel %vm1228, %v1203, 0.0
        %v1241 = vsel %vm1228, %v1208, 0.0
        %v1242 = vsel %vm1228, %v1213, 0.0
        %v1243 = vsel %vm1228, %v1218, 0.0
        %v1244 = vsel %vm1228, %v1223, 0.0
        %vm1245 = vcmask 138240
        %v1246 = vsel %vm1245, %v1229, 0.0
        %1247 = vadd.xlane.f32.xlu0 %v1246
        %v1248 = vpop.xlane.xlu0 %1247
        %v1249 = vsel %vm1245, %v1230, 0.0
        %1250 = vadd.xlane.f32.xlu0 %v1249
        %v1251 = vpop.xlane.xlu0 %1250
        %v1252 = vsel %vm1245, %v1231, 0.0
        %1253 = vadd.xlane.f32.xlu0 %v1252
        %v1254 = vpop.xlane.xlu0 %1253
        %v1255 = vsel %vm1245, %v1232, 0.0
        %1256 = vadd.xlane.f32.xlu0 %v1255
        %v1257 = vpop.xlane.xlu0 %1256
        %v1258 = vsel %vm1245, %v1233, 0.0
        %1259 = vadd.xlane.f32.xlu0 %v1258
        %v1260 = vpop.xlane.xlu0 %1259
        %v1261 = vsel %vm1245, %v1234, 0.0
        %1262 = vadd.xlane.f32.xlu0 %v1261
        %v1263 = vpop.xlane.xlu0 %1262
        %v1264 = vsel %vm1245, %v1235, 0.0
        %1265 = vadd.xlane.f32.xlu0 %v1264
        %v1266 = vpop.xlane.xlu0 %1265
        %v1267 = vsel %vm1245, %v1236, 0.0
        %1268 = vadd.xlane.f32.xlu0 %v1267
        %v1269 = vpop.xlane.xlu0 %1268
        %v1270 = vsel %vm1245, %v1237, 0.0
        %1271 = vadd.xlane.f32.xlu0 %v1270
        %v1272 = vpop.xlane.xlu0 %1271
        %v1273 = vsel %vm1245, %v1238, 0.0
        %1274 = vadd.xlane.f32.xlu0 %v1273
        %v1275 = vpop.xlane.xlu0 %1274
        %v1276 = vsel %vm1245, %v1239, 0.0
        %1277 = vadd.xlane.f32.xlu0 %v1276
        %v1278 = vpop.xlane.xlu0 %1277
        %v1279 = vsel %vm1245, %v1240, 0.0
        %1280 = vadd.xlane.f32.xlu0 %v1279
        %v1281 = vpop.xlane.xlu0 %1280
        %v1282 = vsel %vm1245, %v1241, 0.0
        %1283 = vadd.xlane.f32.xlu0 %v1282
        %v1284 = vpop.xlane.xlu0 %1283
        %v1285 = vsel %vm1245, %v1242, 0.0
        %1286 = vadd.xlane.f32.xlu0 %v1285
        %v1287 = vpop.xlane.xlu0 %1286
        %v1288 = vsel %vm1245, %v1243, 0.0
        %1289 = vadd.xlane.f32.xlu0 %v1288
        %v1290 = vpop.xlane.xlu0 %1289
        %v1291 = vsel %vm1245, %v1244, 0.0
        %1292 = vadd.xlane.f32.xlu0 %v1291
        %v1293 = vpop.xlane.xlu0 %1292
        %v1294 = vld [vmem:[#allocation2] sm:$0xff]
        %v1295 = vld [vmem:[#allocation2 + $0x8] sm:$0xff]
        %v1296 = vld [vmem:[#allocation2 + $0x10] sm:$0xff]
        %v1297 = vld [vmem:[#allocation2 + $0x18] sm:$0xff]
        %v1298 = vld [vmem:[#allocation2 + $0x20] sm:$0xff]
        %v1299 = vld [vmem:[#allocation2 + $0x28] sm:$0xff]
        %v1300 = vld [vmem:[#allocation2 + $0x30] sm:$0xff]
        %v1301 = vld [vmem:[#allocation2 + $0x38] sm:$0xff]
        %v1302 = vld [vmem:[#allocation2 + $0x40] sm:$0xff]
        %v1303 = vld [vmem:[#allocation2 + $0x48] sm:$0xff]
        %v1304 = vld [vmem:[#allocation2 + $0x50] sm:$0xff]
        %v1305 = vld [vmem:[#allocation2 + $0x58] sm:$0xff]
        %v1306 = vld [vmem:[#allocation2 + $0x60] sm:$0xff]
        %v1307 = vld [vmem:[#allocation2 + $0x68] sm:$0xff]
        %v1308 = vld [vmem:[#allocation2 + $0x70] sm:$0xff]
        %v1309 = vld [vmem:[#allocation2 + $0x78] sm:$0xff]
        %vm1310 = vcmp.gt.f32.partialorder %v1294, 0.0
        %vm1311 = vcmp.gt.f32.partialorder %v1295, 0.0
        %vm1312 = vcmp.gt.f32.partialorder %v1296, 0.0
        %vm1313 = vcmp.gt.f32.partialorder %v1297, 0.0
        %vm1314 = vcmp.gt.f32.partialorder %v1298, 0.0
        %vm1315 = vcmp.gt.f32.partialorder %v1299, 0.0
        %vm1316 = vcmp.gt.f32.partialorder %v1300, 0.0
        %vm1317 = vcmp.gt.f32.partialorder %v1301, 0.0
        %vm1318 = vcmp.gt.f32.partialorder %v1302, 0.0
        %vm1319 = vcmp.gt.f32.partialorder %v1303, 0.0
        %vm1320 = vcmp.gt.f32.partialorder %v1304, 0.0
        %vm1321 = vcmp.gt.f32.partialorder %v1305, 0.0
        %vm1322 = vcmp.gt.f32.partialorder %v1306, 0.0
        %vm1323 = vcmp.gt.f32.partialorder %v1307, 0.0
        %vm1324 = vcmp.gt.f32.partialorder %v1308, 0.0
        %vm1325 = vcmp.gt.f32.partialorder %v1309, 0.0
        %v1326 = vsel %vm1310, %v1248, -1e+30
        %v1327 = vsel %vm1311, %v1251, -1e+30
        %v1328 = vsel %vm1312, %v1254, -1e+30
        %v1329 = vsel %vm1313, %v1257, -1e+30
        %v1330 = vsel %vm1314, %v1260, -1e+30
        %v1331 = vsel %vm1315, %v1263, -1e+30
        %v1332 = vsel %vm1316, %v1266, -1e+30
        %v1333 = vsel %vm1317, %v1269, -1e+30
        %v1334 = vsel %vm1318, %v1272, -1e+30
        %v1335 = vsel %vm1319, %v1275, -1e+30
        %v1336 = vsel %vm1320, %v1278, -1e+30
        %v1337 = vsel %vm1321, %v1281, -1e+30
        %v1338 = vsel %vm1322, %v1284, -1e+30
        %v1339 = vsel %vm1323, %v1287, -1e+30
        %v1340 = vsel %vm1324, %v1290, -1e+30
        %v1341 = vsel %vm1325, %v1293, -1e+30
        %v1342 = vmax.f32 %v1326, %v1330
        %v1343 = vmax.f32 %v1327, %v1331
        %v1344 = vmax.f32 %v1328, %v1332
        %v1345 = vmax.f32 %v1329, %v1333
        %v1346 = vmax.f32 %v1342, %v1334
        %v1347 = vmax.f32 %v1343, %v1335
        %v1348 = vmax.f32 %v1344, %v1336
        %v1349 = vmax.f32 %v1345, %v1337
        %v1350 = vmax.f32 %v1346, %v1338
        %v1351 = vmax.f32 %v1347, %v1339
        %v1352 = vmax.f32 %v1348, %v1340
        %v1353 = vmax.f32 %v1349, %v1341
        %v1354 = vmax.f32 %v1350, %v1351
        %v1355 = vmax.f32 %v1352, %v1353
        %v1356 = vmax.f32 %v1354, %v1355
        %v1357 = vrot.slane %v1356, 4
        %v1358 = vmax.f32 %v1356, %v1357
        %v1359 = vrot.slane %v1358, 2
        %v1360 = vmax.f32 %v1358, %v1359
        %v1361 = vrot.slane %v1360, 1
        %v1362 = vmax.f32 %v1360, %v1361
        %v1363 = vsel %vm1310, %v1362, -1e+30
        %v1364 = vsel %vm1311, %v1362, -1e+30
        %v1365 = vsel %vm1312, %v1362, -1e+30
        %v1366 = vsel %vm1313, %v1362, -1e+30
        %v1367 = vsel %vm1314, %v1362, -1e+30
        %v1368 = vsel %vm1315, %v1362, -1e+30
        %v1369 = vsel %vm1316, %v1362, -1e+30
        %v1370 = vsel %vm1317, %v1362, -1e+30
        %v1371 = vsel %vm1318, %v1362, -1e+30
        %v1372 = vsel %vm1319, %v1362, -1e+30
        %v1373 = vsel %vm1320, %v1362, -1e+30
        %v1374 = vsel %vm1321, %v1362, -1e+30
        %v1375 = vsel %vm1322, %v1362, -1e+30
        %v1376 = vsel %vm1323, %v1362, -1e+30
        %v1377 = vsel %vm1324, %v1362, -1e+30
        %v1378 = vsel %vm1325, %v1362, -1e+30
        %1379 = vmax.xlane.f32.xlu0 %v1363
        %v1380 = vpop.xlane.xlu0 %1379
        %1381 = vmax.xlane.f32.xlu0 %v1364
        %v1382 = vpop.xlane.xlu0 %1381
        %1383 = vmax.xlane.f32.xlu0 %v1365
        %v1384 = vpop.xlane.xlu0 %1383
        %1385 = vmax.xlane.f32.xlu0 %v1366
        %v1386 = vpop.xlane.xlu0 %1385
        %1387 = vmax.xlane.f32.xlu0 %v1367
        %v1388 = vpop.xlane.xlu0 %1387
        %1389 = vmax.xlane.f32.xlu0 %v1368
        %v1390 = vpop.xlane.xlu0 %1389
        %1391 = vmax.xlane.f32.xlu0 %v1369
        %v1392 = vpop.xlane.xlu0 %1391
        %1393 = vmax.xlane.f32.xlu0 %v1370
        %v1394 = vpop.xlane.xlu0 %1393
        %1395 = vmax.xlane.f32.xlu0 %v1371
        %v1396 = vpop.xlane.xlu0 %1395
        %1397 = vmax.xlane.f32.xlu0 %v1372
        %v1398 = vpop.xlane.xlu0 %1397
        %1399 = vmax.xlane.f32.xlu0 %v1373
        %v1400 = vpop.xlane.xlu0 %1399
        %1401 = vmax.xlane.f32.xlu0 %v1374
        %v1402 = vpop.xlane.xlu0 %1401
        %1403 = vmax.xlane.f32.xlu0 %v1375
        %v1404 = vpop.xlane.xlu0 %1403
        %1405 = vmax.xlane.f32.xlu0 %v1376
        %v1406 = vpop.xlane.xlu0 %1405
        %1407 = vmax.xlane.f32.xlu0 %v1377
        %v1408 = vpop.xlane.xlu0 %1407
        %1409 = vmax.xlane.f32.xlu0 %v1378
        %v1410 = vpop.xlane.xlu0 %1409
        %v1411 = vsub.f32 %v1248, %v1380
        %v1412 = vsub.f32 %v1251, %v1382
        %v1413 = vsub.f32 %v1254, %v1384
        %v1414 = vsub.f32 %v1257, %v1386
        %v1415 = vsub.f32 %v1260, %v1388
        %v1416 = vsub.f32 %v1263, %v1390
        %v1417 = vsub.f32 %v1266, %v1392
        %v1418 = vsub.f32 %v1269, %v1394
        %v1419 = vsub.f32 %v1272, %v1396
        %v1420 = vsub.f32 %v1275, %v1398
        %v1421 = vsub.f32 %v1278, %v1400
        %v1422 = vsub.f32 %v1281, %v1402
        %v1423 = vsub.f32 %v1284, %v1404
        %v1424 = vsub.f32 %v1287, %v1406
        %v1425 = vsub.f32 %v1290, %v1408
        %v1426 = vsub.f32 %v1293, %v1410
        %v1427 = vmul.f32 %v1411, 1.442695
        %v1428 = vpow.pop %v1427
        %v1429 = vmul.f32 %v1412, 1.442695
        %v1430 = vpow.pop %v1429
        %v1431 = vmul.f32 %v1413, 1.442695
        %v1432 = vpow.pop %v1431
        %v1433 = vmul.f32 %v1414, 1.442695
        %v1434 = vpow.pop %v1433
        %v1435 = vmul.f32 %v1415, 1.442695
        %v1436 = vpow.pop %v1435
        %v1437 = vmul.f32 %v1416, 1.442695
        %v1438 = vpow.pop %v1437
        %v1439 = vmul.f32 %v1417, 1.442695
        %v1440 = vpow.pop %v1439
        %v1441 = vmul.f32 %v1418, 1.442695
        %v1442 = vpow.pop %v1441
        %v1443 = vmul.f32 %v1419, 1.442695
        %v1444 = vpow.pop %v1443
        %v1445 = vmul.f32 %v1420, 1.442695
        %v1446 = vpow.pop %v1445
        %v1447 = vmul.f32 %v1421, 1.442695
        %v1448 = vpow.pop %v1447
        %v1449 = vmul.f32 %v1422, 1.442695
        %v1450 = vpow.pop %v1449
        %v1451 = vmul.f32 %v1423, 1.442695
        %v1452 = vpow.pop %v1451
        %v1453 = vmul.f32 %v1424, 1.442695
        %v1454 = vpow.pop %v1453
        %v1455 = vmul.f32 %v1425, 1.442695
        %v1456 = vpow.pop %v1455
        %v1457 = vmul.f32 %v1426, 1.442695
        %v1458 = vpow.pop %v1457
        %v1459 = vmul.f32 %v1294, %v1428
        %v1460 = vmul.f32 %v1295, %v1430
        %v1461 = vmul.f32 %v1296, %v1432
        %v1462 = vmul.f32 %v1297, %v1434
        %v1463 = vmul.f32 %v1298, %v1436
        %v1464 = vmul.f32 %v1299, %v1438
        %v1465 = vmul.f32 %v1300, %v1440
        %v1466 = vmul.f32 %v1301, %v1442
        %v1467 = vmul.f32 %v1302, %v1444
        %v1468 = vmul.f32 %v1303, %v1446
        %v1469 = vmul.f32 %v1304, %v1448
        %v1470 = vmul.f32 %v1305, %v1450
        %v1471 = vmul.f32 %v1306, %v1452
        %v1472 = vmul.f32 %v1307, %v1454
        %v1473 = vmul.f32 %v1308, %v1456
        %v1474 = vmul.f32 %v1309, %v1458
        %1491 = vrot.lane.b32.xlu0 %v1148, 16
        %v1492 = vpop.permute.xlu0 %1491
        %1493 = vrot.lane.b32.xlu0 %v1153, 16
        %v1494 = vpop.permute.xlu0 %1493
        %1495 = vrot.lane.b32.xlu0 %v1158, 16
        %v1496 = vpop.permute.xlu0 %1495
        %1497 = vrot.lane.b32.xlu0 %v1163, 16
        %v1498 = vpop.permute.xlu0 %1497
        %1499 = vrot.lane.b32.xlu0 %v1168, 16
        %v1500 = vpop.permute.xlu0 %1499
        %1501 = vrot.lane.b32.xlu0 %v1173, 16
        %v1502 = vpop.permute.xlu0 %1501
        %1503 = vrot.lane.b32.xlu0 %v1178, 16
        %v1504 = vpop.permute.xlu0 %1503
        %1505 = vrot.lane.b32.xlu0 %v1183, 16
        %v1506 = vpop.permute.xlu0 %1505
        %1507 = vrot.lane.b32.xlu0 %v1188, 16
        %v1508 = vpop.permute.xlu0 %1507
        %1509 = vrot.lane.b32.xlu0 %v1193, 16
        %v1510 = vpop.permute.xlu0 %1509
        %1511 = vrot.lane.b32.xlu0 %v1198, 16
        %v1512 = vpop.permute.xlu0 %1511
        %1513 = vrot.lane.b32.xlu0 %v1203, 16
        %v1514 = vpop.permute.xlu0 %1513
        %1515 = vrot.lane.b32.xlu0 %v1208, 16
        %v1516 = vpop.permute.xlu0 %1515
        %1517 = vrot.lane.b32.xlu0 %v1213, 16
        %v1518 = vpop.permute.xlu0 %1517
        %1519 = vrot.lane.b32.xlu0 %v1218, 16
        %v1520 = vpop.permute.xlu0 %1519
        %1521 = vrot.lane.b32.xlu0 %v1223, 16
        %v1522 = vpop.permute.xlu0 %1521
        %1539 = vrot.lane.b32.xlu0 %v1148, 32
        %v1540 = vpop.permute.xlu0 %1539
        %1541 = vrot.lane.b32.xlu0 %v1153, 32
        %v1542 = vpop.permute.xlu0 %1541
        %1543 = vrot.lane.b32.xlu0 %v1158, 32
        %v1544 = vpop.permute.xlu0 %1543
        %1545 = vrot.lane.b32.xlu0 %v1163, 32
        %v1546 = vpop.permute.xlu0 %1545
        %1547 = vrot.lane.b32.xlu0 %v1168, 32
        %v1548 = vpop.permute.xlu0 %1547
        %1549 = vrot.lane.b32.xlu0 %v1173, 32
        %v1550 = vpop.permute.xlu0 %1549
        %1551 = vrot.lane.b32.xlu0 %v1178, 32
        %v1552 = vpop.permute.xlu0 %1551
        %1553 = vrot.lane.b32.xlu0 %v1183, 32
        %v1554 = vpop.permute.xlu0 %1553
        %1555 = vrot.lane.b32.xlu0 %v1188, 32
        %v1556 = vpop.permute.xlu0 %1555
        %1557 = vrot.lane.b32.xlu0 %v1193, 32
        %v1558 = vpop.permute.xlu0 %1557
        %1559 = vrot.lane.b32.xlu0 %v1198, 32
        %v1560 = vpop.permute.xlu0 %1559
        %1561 = vrot.lane.b32.xlu0 %v1203, 32
        %v1562 = vpop.permute.xlu0 %1561
        %1563 = vrot.lane.b32.xlu0 %v1208, 32
        %v1564 = vpop.permute.xlu0 %1563
        %1565 = vrot.lane.b32.xlu0 %v1213, 32
        %v1566 = vpop.permute.xlu0 %1565
        %1567 = vrot.lane.b32.xlu0 %v1218, 32
        %v1568 = vpop.permute.xlu0 %1567
        %1569 = vrot.lane.b32.xlu0 %v1223, 32
        %v1570 = vpop.permute.xlu0 %1569
        %1587 = vrot.lane.b32.xlu0 %v1148, 48
        %v1588 = vpop.permute.xlu0 %1587
        %1589 = vrot.lane.b32.xlu0 %v1153, 48
        %v1590 = vpop.permute.xlu0 %1589
        %1591 = vrot.lane.b32.xlu0 %v1158, 48
        %v1592 = vpop.permute.xlu0 %1591
        %1593 = vrot.lane.b32.xlu0 %v1163, 48
        %v1594 = vpop.permute.xlu0 %1593
        %1595 = vrot.lane.b32.xlu0 %v1168, 48
        %v1596 = vpop.permute.xlu0 %1595
        %1597 = vrot.lane.b32.xlu0 %v1173, 48
        %v1598 = vpop.permute.xlu0 %1597
        %1599 = vrot.lane.b32.xlu0 %v1178, 48
        %v1600 = vpop.permute.xlu0 %1599
        %1601 = vrot.lane.b32.xlu0 %v1183, 48
        %v1602 = vpop.permute.xlu0 %1601
        %1603 = vrot.lane.b32.xlu0 %v1188, 48
        %v1604 = vpop.permute.xlu0 %1603
        %1605 = vrot.lane.b32.xlu0 %v1193, 48
        %v1606 = vpop.permute.xlu0 %1605
        %1607 = vrot.lane.b32.xlu0 %v1198, 48
        %v1608 = vpop.permute.xlu0 %1607
        %1609 = vrot.lane.b32.xlu0 %v1203, 48
        %v1610 = vpop.permute.xlu0 %1609
        %1611 = vrot.lane.b32.xlu0 %v1208, 48
        %v1612 = vpop.permute.xlu0 %1611
        %1613 = vrot.lane.b32.xlu0 %v1213, 48
        %v1614 = vpop.permute.xlu0 %1613
        %1615 = vrot.lane.b32.xlu0 %v1218, 48
        %v1616 = vpop.permute.xlu0 %1615
        %1617 = vrot.lane.b32.xlu0 %v1223, 48
        %v1618 = vpop.permute.xlu0 %1617
        %1635 = vrot.lane.b32.xlu0 %v1148, 64
        %v1636 = vpop.permute.xlu0 %1635
        %1637 = vrot.lane.b32.xlu0 %v1153, 64
        %v1638 = vpop.permute.xlu0 %1637
        %1639 = vrot.lane.b32.xlu0 %v1158, 64
        %v1640 = vpop.permute.xlu0 %1639
        %1641 = vrot.lane.b32.xlu0 %v1163, 64
        %v1642 = vpop.permute.xlu0 %1641
        %1643 = vrot.lane.b32.xlu0 %v1168, 64
        %v1644 = vpop.permute.xlu0 %1643
        %1645 = vrot.lane.b32.xlu0 %v1173, 64
        %v1646 = vpop.permute.xlu0 %1645
        %1647 = vrot.lane.b32.xlu0 %v1178, 64
        %v1648 = vpop.permute.xlu0 %1647
        %1649 = vrot.lane.b32.xlu0 %v1183, 64
        %v1650 = vpop.permute.xlu0 %1649
        %1651 = vrot.lane.b32.xlu0 %v1188, 64
        %v1652 = vpop.permute.xlu0 %1651
        %1653 = vrot.lane.b32.xlu0 %v1193, 64
        %v1654 = vpop.permute.xlu0 %1653
        %1655 = vrot.lane.b32.xlu0 %v1198, 64
        %v1656 = vpop.permute.xlu0 %1655
        %1657 = vrot.lane.b32.xlu0 %v1203, 64
        %v1658 = vpop.permute.xlu0 %1657
        %1659 = vrot.lane.b32.xlu0 %v1208, 64
        %v1660 = vpop.permute.xlu0 %1659
        %1661 = vrot.lane.b32.xlu0 %v1213, 64
        %v1662 = vpop.permute.xlu0 %1661
        %1663 = vrot.lane.b32.xlu0 %v1218, 64
        %v1664 = vpop.permute.xlu0 %1663
        %1665 = vrot.lane.b32.xlu0 %v1223, 64
        %v1666 = vpop.permute.xlu0 %1665
        %1683 = vrot.lane.b32.xlu0 %v1148, 80
        %v1684 = vpop.permute.xlu0 %1683
        %1685 = vrot.lane.b32.xlu0 %v1153, 80
        %v1686 = vpop.permute.xlu0 %1685
        %1687 = vrot.lane.b32.xlu0 %v1158, 80
        %v1688 = vpop.permute.xlu0 %1687
        %1689 = vrot.lane.b32.xlu0 %v1163, 80
        %v1690 = vpop.permute.xlu0 %1689
        %1691 = vrot.lane.b32.xlu0 %v1168, 80
        %v1692 = vpop.permute.xlu0 %1691
        %1693 = vrot.lane.b32.xlu0 %v1173, 80
        %v1694 = vpop.permute.xlu0 %1693
        %1695 = vrot.lane.b32.xlu0 %v1178, 80
        %v1696 = vpop.permute.xlu0 %1695
        %1697 = vrot.lane.b32.xlu0 %v1183, 80
        %v1698 = vpop.permute.xlu0 %1697
        %1699 = vrot.lane.b32.xlu0 %v1188, 80
        %v1700 = vpop.permute.xlu0 %1699
        %1701 = vrot.lane.b32.xlu0 %v1193, 80
        %v1702 = vpop.permute.xlu0 %1701
        %1703 = vrot.lane.b32.xlu0 %v1198, 80
        %v1704 = vpop.permute.xlu0 %1703
        %1705 = vrot.lane.b32.xlu0 %v1203, 80
        %v1706 = vpop.permute.xlu0 %1705
        %1707 = vrot.lane.b32.xlu0 %v1208, 80
        %v1708 = vpop.permute.xlu0 %1707
        %1709 = vrot.lane.b32.xlu0 %v1213, 80
        %v1710 = vpop.permute.xlu0 %1709
        %1711 = vrot.lane.b32.xlu0 %v1218, 80
        %v1712 = vpop.permute.xlu0 %1711
        %1713 = vrot.lane.b32.xlu0 %v1223, 80
        %v1714 = vpop.permute.xlu0 %1713
        %1731 = vrot.lane.b32.xlu0 %v1148, 96
        %v1732 = vpop.permute.xlu0 %1731
        %1733 = vrot.lane.b32.xlu0 %v1153, 96
        %v1734 = vpop.permute.xlu0 %1733
        %1735 = vrot.lane.b32.xlu0 %v1158, 96
        %v1736 = vpop.permute.xlu0 %1735
        %1737 = vrot.lane.b32.xlu0 %v1163, 96
        %v1738 = vpop.permute.xlu0 %1737
        %1739 = vrot.lane.b32.xlu0 %v1168, 96
        %v1740 = vpop.permute.xlu0 %1739
        %1741 = vrot.lane.b32.xlu0 %v1173, 96
        %v1742 = vpop.permute.xlu0 %1741
        %1743 = vrot.lane.b32.xlu0 %v1178, 96
        %v1744 = vpop.permute.xlu0 %1743
        %1745 = vrot.lane.b32.xlu0 %v1183, 96
        %v1746 = vpop.permute.xlu0 %1745
        %1747 = vrot.lane.b32.xlu0 %v1188, 96
        %v1748 = vpop.permute.xlu0 %1747
        %1749 = vrot.lane.b32.xlu0 %v1193, 96
        %v1750 = vpop.permute.xlu0 %1749
        %1751 = vrot.lane.b32.xlu0 %v1198, 96
        %v1752 = vpop.permute.xlu0 %1751
        %1753 = vrot.lane.b32.xlu0 %v1203, 96
        %v1754 = vpop.permute.xlu0 %1753
        %1755 = vrot.lane.b32.xlu0 %v1208, 96
        %v1756 = vpop.permute.xlu0 %1755
        %1757 = vrot.lane.b32.xlu0 %v1213, 96
        %v1758 = vpop.permute.xlu0 %1757
        %1759 = vrot.lane.b32.xlu0 %v1218, 96
        %v1760 = vpop.permute.xlu0 %1759
        %1761 = vrot.lane.b32.xlu0 %v1223, 96
        %v1762 = vpop.permute.xlu0 %1761
        %1779 = vrot.lane.b32.xlu0 %v1148, 112
        %v1780 = vpop.permute.xlu0 %1779
        %1781 = vrot.lane.b32.xlu0 %v1153, 112
        %v1782 = vpop.permute.xlu0 %1781
        %1783 = vrot.lane.b32.xlu0 %v1158, 112
        %v1784 = vpop.permute.xlu0 %1783
        %1785 = vrot.lane.b32.xlu0 %v1163, 112
        %v1786 = vpop.permute.xlu0 %1785
        %1787 = vrot.lane.b32.xlu0 %v1168, 112
        %v1788 = vpop.permute.xlu0 %1787
        %1789 = vrot.lane.b32.xlu0 %v1173, 112
        %v1790 = vpop.permute.xlu0 %1789
        %1791 = vrot.lane.b32.xlu0 %v1178, 112
        %v1792 = vpop.permute.xlu0 %1791
        %1793 = vrot.lane.b32.xlu0 %v1183, 112
        %v1794 = vpop.permute.xlu0 %1793
        %1795 = vrot.lane.b32.xlu0 %v1188, 112
        %v1796 = vpop.permute.xlu0 %1795
        %1797 = vrot.lane.b32.xlu0 %v1193, 112
        %v1798 = vpop.permute.xlu0 %1797
        %1799 = vrot.lane.b32.xlu0 %v1198, 112
        %v1800 = vpop.permute.xlu0 %1799
        %1801 = vrot.lane.b32.xlu0 %v1203, 112
        %v1802 = vpop.permute.xlu0 %1801
        %1803 = vrot.lane.b32.xlu0 %v1208, 112
        %v1804 = vpop.permute.xlu0 %1803
        %1805 = vrot.lane.b32.xlu0 %v1213, 112
        %v1806 = vpop.permute.xlu0 %1805
        %1807 = vrot.lane.b32.xlu0 %v1218, 112
        %v1808 = vpop.permute.xlu0 %1807
        %1809 = vrot.lane.b32.xlu0 %v1223, 112
        %v1810 = vpop.permute.xlu0 %1809
        %v1827 = vsel %vm554, %v1148, %v1492
        %v1828 = vsel %vm554, %v1153, %v1494
        %v1829 = vsel %vm554, %v1158, %v1496
        %v1830 = vsel %vm554, %v1163, %v1498
        %v1831 = vsel %vm554, %v1168, %v1500
        %v1832 = vsel %vm554, %v1173, %v1502
        %v1833 = vsel %vm554, %v1178, %v1504
        %v1834 = vsel %vm554, %v1183, %v1506
        %v1835 = vsel %vm554, %v1188, %v1508
        %v1836 = vsel %vm554, %v1193, %v1510
        %v1837 = vsel %vm554, %v1198, %v1512
        %v1838 = vsel %vm554, %v1203, %v1514
        %v1839 = vsel %vm554, %v1208, %v1516
        %v1840 = vsel %vm554, %v1213, %v1518
        %v1841 = vsel %vm554, %v1218, %v1520
        %v1842 = vsel %vm554, %v1223, %v1522
        %v1843 = vsel %vm582, %v1827, %v1540
        %v1844 = vsel %vm582, %v1828, %v1542
        %v1845 = vsel %vm582, %v1829, %v1544
        %v1846 = vsel %vm582, %v1830, %v1546
        %v1847 = vsel %vm582, %v1831, %v1548
        %v1848 = vsel %vm582, %v1832, %v1550
        %v1849 = vsel %vm582, %v1833, %v1552
        %v1850 = vsel %vm582, %v1834, %v1554
        %v1851 = vsel %vm582, %v1835, %v1556
        %v1852 = vsel %vm582, %v1836, %v1558
        %v1853 = vsel %vm582, %v1837, %v1560
        %v1854 = vsel %vm582, %v1838, %v1562
        %v1855 = vsel %vm582, %v1839, %v1564
        %v1856 = vsel %vm582, %v1840, %v1566
        %v1857 = vsel %vm582, %v1841, %v1568
        %v1858 = vsel %vm582, %v1842, %v1570
        %vm1859 = vcmask 392192
        %v1860 = vsel %vm1859, %v1843, %v1588
        %v1861 = vsel %vm1859, %v1844, %v1590
        %v1862 = vsel %vm1859, %v1845, %v1592
        %v1863 = vsel %vm1859, %v1846, %v1594
        %v1864 = vsel %vm1859, %v1847, %v1596
        %v1865 = vsel %vm1859, %v1848, %v1598
        %v1866 = vsel %vm1859, %v1849, %v1600
        %v1867 = vsel %vm1859, %v1850, %v1602
        %v1868 = vsel %vm1859, %v1851, %v1604
        %v1869 = vsel %vm1859, %v1852, %v1606
        %v1870 = vsel %vm1859, %v1853, %v1608
        %v1871 = vsel %vm1859, %v1854, %v1610
        %v1872 = vsel %vm1859, %v1855, %v1612
        %v1873 = vsel %vm1859, %v1856, %v1614
        %v1874 = vsel %vm1859, %v1857, %v1616
        %v1875 = vsel %vm1859, %v1858, %v1618
        %v1876 = vsel %vm1032, %v1860, %v1636
        %v1877 = vsel %vm1032, %v1861, %v1638
        %v1878 = vsel %vm1032, %v1862, %v1640
        %v1879 = vsel %vm1032, %v1863, %v1642
        %v1880 = vsel %vm1032, %v1864, %v1644
        %v1881 = vsel %vm1032, %v1865, %v1646
        %v1882 = vsel %vm1032, %v1866, %v1648
        %v1883 = vsel %vm1032, %v1867, %v1650
        %v1884 = vsel %vm1032, %v1868, %v1652
        %v1885 = vsel %vm1032, %v1869, %v1654
        %v1886 = vsel %vm1032, %v1870, %v1656
        %v1887 = vsel %vm1032, %v1871, %v1658
        %v1888 = vsel %vm1032, %v1872, %v1660
        %v1889 = vsel %vm1032, %v1873, %v1662
        %v1890 = vsel %vm1032, %v1874, %v1664
        %v1891 = vsel %vm1032, %v1875, %v1666
        %vm1892 = vcmask 654336
        %v1893 = vsel %vm1892, %v1876, %v1684
        %v1894 = vsel %vm1892, %v1877, %v1686
        %v1895 = vsel %vm1892, %v1878, %v1688
        %v1896 = vsel %vm1892, %v1879, %v1690
        %v1897 = vsel %vm1892, %v1880, %v1692
        %v1898 = vsel %vm1892, %v1881, %v1694
        %v1899 = vsel %vm1892, %v1882, %v1696
        %v1900 = vsel %vm1892, %v1883, %v1698
        %v1901 = vsel %vm1892, %v1884, %v1700
        %v1902 = vsel %vm1892, %v1885, %v1702
        %v1903 = vsel %vm1892, %v1886, %v1704
        %v1904 = vsel %vm1892, %v1887, %v1706
        %v1905 = vsel %vm1892, %v1888, %v1708
        %v1906 = vsel %vm1892, %v1889, %v1710
        %v1907 = vsel %vm1892, %v1890, %v1712
        %v1908 = vsel %vm1892, %v1891, %v1714
        %vm1909 = vcmask 785408
        %v1910 = vsel %vm1909, %v1893, %v1732
        %v1911 = vsel %vm1909, %v1894, %v1734
        %v1912 = vsel %vm1909, %v1895, %v1736
        %v1913 = vsel %vm1909, %v1896, %v1738
        %v1914 = vsel %vm1909, %v1897, %v1740
        %v1915 = vsel %vm1909, %v1898, %v1742
        %v1916 = vsel %vm1909, %v1899, %v1744
        %v1917 = vsel %vm1909, %v1900, %v1746
        %v1918 = vsel %vm1909, %v1901, %v1748
        %v1919 = vsel %vm1909, %v1902, %v1750
        %v1920 = vsel %vm1909, %v1903, %v1752
        %v1921 = vsel %vm1909, %v1904, %v1754
        %v1922 = vsel %vm1909, %v1905, %v1756
        %v1923 = vsel %vm1909, %v1906, %v1758
        %v1924 = vsel %vm1909, %v1907, %v1760
        %v1925 = vsel %vm1909, %v1908, %v1762
        %vm1926 = vcmask 916480
        %v1927 = vsel %vm1926, %v1910, %v1780
        %v1928 = vsel %vm1926, %v1911, %v1782
        %v1929 = vsel %vm1926, %v1912, %v1784
        %v1930 = vsel %vm1926, %v1913, %v1786
        %v1931 = vsel %vm1926, %v1914, %v1788
        %v1932 = vsel %vm1926, %v1915, %v1790
        %v1933 = vsel %vm1926, %v1916, %v1792
        %v1934 = vsel %vm1926, %v1917, %v1794
        %v1935 = vsel %vm1926, %v1918, %v1796
        %v1936 = vsel %vm1926, %v1919, %v1798
        %v1937 = vsel %vm1926, %v1920, %v1800
        %v1938 = vsel %vm1926, %v1921, %v1802
        %v1939 = vsel %vm1926, %v1922, %v1804
        %v1940 = vsel %vm1926, %v1923, %v1806
        %v1941 = vsel %vm1926, %v1924, %v1808
        %v1942 = vsel %vm1926, %v1925, %v1810
        %v1943 = vmul.f32 %v1459, %v1927
        %v1944 = vmul.f32 %v1460, %v1928
        %v1945 = vmul.f32 %v1461, %v1929
        %v1946 = vmul.f32 %v1462, %v1930
        %v1947 = vmul.f32 %v1463, %v1931
        %v1948 = vmul.f32 %v1464, %v1932
        %v1949 = vmul.f32 %v1465, %v1933
        %v1950 = vmul.f32 %v1466, %v1934
        %v1951 = vmul.f32 %v1467, %v1935
        %v1952 = vmul.f32 %v1468, %v1936
        %v1953 = vmul.f32 %v1469, %v1937
        %v1954 = vmul.f32 %v1470, %v1938
        %v1955 = vmul.f32 %v1471, %v1939
        %v1956 = vmul.f32 %v1472, %v1940
        %v1957 = vmul.f32 %v1473, %v1941
        %v1958 = vmul.f32 %v1474, %v1942
        %v1959 = vadd.f32 %v1943, %v1944
        %v1960 = vadd.f32 %v1959, %v1945
        %v1961 = vadd.f32 %v1960, %v1946
        %v1962 = vadd.f32 %v1961, %v1947
        %v1963 = vadd.f32 %v1962, %v1948
        %v1964 = vadd.f32 %v1963, %v1949
        %v1965 = vadd.f32 %v1964, %v1950
        %v1966 = vadd.f32 %v1965, %v1951
        %v1967 = vadd.f32 %v1966, %v1952
        %v1968 = vadd.f32 %v1967, %v1953
        %v1969 = vadd.f32 %v1968, %v1954
        %v1970 = vadd.f32 %v1969, %v1955
        %v1971 = vadd.f32 %v1970, %v1956
        %v1972 = vadd.f32 %v1971, %v1957
        %v1973 = vadd.f32 %v1972, %v1958
        %v1974 = vrot.slane %v1973, 4
        %v1975 = vadd.f32 %v1973, %v1974
        %v1976 = vrot.slane %v1975, 2
        %v1977 = vadd.f32 %v1975, %v1976
        %v1978 = vrot.slane %v1977, 1
        %v1979 = vadd.f32 %v1977, %v1978
        %v1980 = vadd.f32 %v1459, %v1460
        %v1981 = vadd.f32 %v1980, %v1461
        %v1982 = vadd.f32 %v1981, %v1462
        %v1983 = vadd.f32 %v1982, %v1463
        %v1984 = vadd.f32 %v1983, %v1464
        %v1985 = vadd.f32 %v1984, %v1465
        %v1986 = vadd.f32 %v1985, %v1466
        %v1987 = vadd.f32 %v1986, %v1467
        %v1988 = vadd.f32 %v1987, %v1468
        %v1989 = vadd.f32 %v1988, %v1469
        %v1990 = vadd.f32 %v1989, %v1470
        %v1991 = vadd.f32 %v1990, %v1471
        %v1992 = vadd.f32 %v1991, %v1472
        %v1993 = vadd.f32 %v1992, %v1473
        %v1994 = vadd.f32 %v1993, %v1474
        %v1995 = vrot.slane %v1994, 4
        %v1996 = vadd.f32 %v1994, %v1995
        %v1997 = vrot.slane %v1996, 2
        %v1998 = vadd.f32 %v1996, %v1997
        %v1999 = vrot.slane %v1998, 1
        %v2000 = vadd.f32 %v1998, %v1999
        %v2001 = vrcp.pop %v2000
        %v2002 = vmul.f32 %v1979, %v2001
        %2003 = vst [vmem:[%s301] sm:$0x1] %v2002
        %s2004 = sand.u32 %s187, 1
        %s2005 = scalar_lea.sflag [#allocation4], %s2004
        %s2006 = sand.u32 %s187, 1
        %s2007 = scalar_lea.vmem [#allocation5], %s2006
        // Predicated region
        $region53: #{tpu_custom_call.1} parent=47 // pred_check
          %p2008 = pneg %p197
        $region54: #{tpu_custom_call.1} parent=47 // pred_check_branch
          %2010 = sbr.rel (%p2008) target = $region56
        $region55: #{tpu_custom_call.1} parent=47 // pred_region
          %s2012 = ssub.s32 16, 16
          %2013 = vsyncadd %s2005, %s2012
          %s2014 = smul.addr %s22, 16
          %s2015 = scalar_lea.hbm %s7, %s2014
          %s2017 = sshll.u32 %s2007, 4
          %s2018 = int_to_ptr.vmem [resolvable:$true] %s2017
          %2020 = dma.vmem_to_hbm [thread:$0]  %s2018, 16, %s2015, %s2005
        $region56: #{tpu_custom_call.1} parent=47 // pred_fallthru
          _
      $region48: #{tpu_custom_call.1} parent=5 // pred_fallthru
        _
      %p2021 = scmp.le.s32.totalorder 2, %s17
      // Predicated region
      $region57: #{tpu_custom_call.1} parent=5 // pred_check
        %p2022 = pneg %p2021
      $region58: #{tpu_custom_call.1} parent=5 // pred_check_branch
        %2024 = sbr.rel (%p2022) target = $region60
      $region59: #{tpu_custom_call.1} parent=5 // pred_region
        %s2025 = ssub.s32 %s17, 2
        // Predicated region
        $region61: #{tpu_custom_call.1} parent=59 // pred_check
          %p2026 = pneg %p203
        $region62: #{tpu_custom_call.1} parent=59 // pred_check_branch
          %2028 = sbr.rel (%p2026) target = $region64
        $region63: #{tpu_custom_call.1} parent=59 // pred_region
          %s2029 = sand.u32 %s188, 1
          %s2030 = scalar_lea.sflag [#allocation4], %s2029
          %s2031 = sand.u32 %s188, 1
          %s2032 = scalar_lea.vmem [#allocation5], %s2031
          %2033 = dma.done %s2030, 16
        $region64: #{tpu_custom_call.1} parent=59 // pred_fallthru
          _
      $region60: #{tpu_custom_call.1} parent=5 // pred_fallthru
        _
    $region6: #{tpu_custom_call.1} parent=1 // loop_footer
      %s21 = sadd.s32 1, %s17
    $region7: #{tpu_custom_call.1} parent=1 // loop_footer_branch
      %16 = sbr.rel target = $region3
    $region8: #{tpu_custom_call.1} parent=1 // loop_exit
      _
    %2034 = vsyncpa [#allocation3], 1
    %s2035 = scalar_lea.sflag [#allocation3], 1
    %2036 = vsyncpa %s2035, 1
    %2037 = vsyncpa [#allocation4], 1
    %s2038 = scalar_lea.sflag [#allocation4], 1
    %2039 = vsyncpa %s2038, 1

</llo_original>
